<compile_context>
chip_gen: v5e
topology: v5e:2x2
jax: 0.10.0
libtpu: 0.0.40
codegen_flags: <defaults>
</compile_context>

<pallas_src>
import functools
import math

import jax
import jax.numpy as jnp
from jax.experimental import pallas as pl
from jax.experimental.pallas import tpu as pltpu


def _conv3x3s2_kernel(a_ref, ah_ref, b_ref, bh_ref, c_ref, d_ref,
                      w_ref, bias_ref, o_ref, *, precision):
    """One (batch, output-row-block) step of the fused 3x3 / stride-2 conv.

    a_ref  : (1, TH, Wo+1, C)  even input rows 2r,   even cols 2w
    ah_ref : (1, 1,  Wo+1, C)  even input row  2*TH  (1-row halo)
    b_ref  : (1, TH, Wo,   C)  even input rows 2r,   odd  cols 2w+1
    bh_ref : (1, 1,  Wo,   C)  halo row for b
    c_ref  : (1, TH, Wo+1, C)  odd  input rows 2r+1, even cols
    d_ref  : (1, TH, Wo,   C)  odd  input rows 2r+1, odd  cols
    w_ref  : (3, 3C, Cout)     per-kw weights, K stacked (kh=0, kh=1, kh=2)
    bias_ref : (1, Cout)
    o_ref  : (1, TH, Wo, Cout)
    """
    _, TH, Wo, Cout = o_ref.shape
    C = d_ref.shape[-1]

    a = a_ref[...][0]                  # (TH, Wo+1, C)
    ah = ah_ref[...][0]                # (1,  Wo+1, C)
    b = b_ref[...][0]                  # (TH, Wo,   C)
    bh = bh_ref[...][0]                # (1,  Wo,   C)
    c = c_ref[...][0]                  # (TH, Wo+1, C)
    d = d_ref[...][0]                  # (TH, Wo,   C)
    w = w_ref[...]                     # (3, 3C, Cout)
    bias = bias_ref[...].astype(jnp.float32)

    # Row r+1 slabs (kh = 2 taps): shift main rows by one and append the halo.
    if TH > 1:
        a_hi = jnp.concatenate([a[1:], ah], axis=0)   # (TH, Wo+1, C)
        b_hi = jnp.concatenate([b[1:], bh], axis=0)   # (TH, Wo,   C)
    else:
        a_hi = ah
        b_hi = bh

    # One lhs per kw tap with K = 3*Cin, channel-stacked in kh order to match w.
    lhs0 = jnp.concatenate([a[:, :Wo], c[:, :Wo], a_hi[:, :Wo]], axis=-1)  # kw=0
    lhs1 = jnp.concatenate([b, d, b_hi], axis=-1)                          # kw=1
    lhs2 = jnp.concatenate([a[:, 1:], c[:, 1:], a_hi[:, 1:]], axis=-1)     # kw=2

    M = TH * Wo
    K = 3 * C
    acc = jnp.dot(lhs0.reshape(M, K), w[0],
                  preferred_element_type=jnp.float32, precision=precision)
    acc = acc + jnp.dot(lhs1.reshape(M, K), w[1],
                        preferred_element_type=jnp.float32, precision=precision)
    acc = acc + jnp.dot(lhs2.reshape(M, K), w[2],
                        preferred_element_type=jnp.float32, precision=precision)
    acc = acc + bias
    o_ref[...] = acc.reshape(1, TH, Wo, Cout).astype(o_ref.dtype)


def _largest_divisor_leq(n, cap):
    cap = int(max(1, min(n, cap)))
    for dv in range(cap, 0, -1):
        if n % dv == 0:
            return dv
    return 1


def _tpu_vmem_capacity_bytes():
    try:
        return int(pltpu.get_tpu_info().vmem_capacity_bytes)
    except Exception:
        return 64 * 1024 * 1024    # conservative (v7x-sized) fallback


def chameleon_conv_downsample(x_nchw, weight_oihw, bias, *, row_tile=None):
    """Forward pass of ChameleonVQVAEEncoderConvDownsample.

    x_nchw:      (B, C, H, W)
    weight_oihw: (C, C, 3, 3)  (nn.Conv2d layout)
    bias:        (C,)
    returns:     (B, C, Ho, Wo) with Ho = (H+1-3)//2 + 1, Wo likewise.
    """
    B, C, H, W = x_nchw.shape
    if H < 2 or W < 2:
        raise ValueError("spatial dims must be >= 2 for this 3x3/stride-2 conv")
    Hp, Wp = H + 1, W + 1
    Ho = (Hp - 3) // 2 + 1
    Wo = (Wp - 3) // 2 + 1

    # ---- layout glue (XLA fuses transpose + pad into the 4 phase copies) ---
    # TODO(synk): if the surrounding model carries NHWC activations, take NHWC
    # in / return NHWC out and fold the zero pad into the last row/col block
    # to drop these full-tensor HBM passes.
    x = jnp.transpose(x_nchw, (0, 2, 3, 1))                  # (B, H, W, C)
    x = jnp.pad(x, ((0, 0), (0, 1), (0, 1), (0, 0)))         # (B, Hp, Wp, C)

    # 2x2 phase deinterleave: exact partition of the rows/cols the conv reads
    # (no duplicated HBM data) -> every tap is a contiguous slab in the kernel.
    pa = x[:, 0:2 * Ho + 1:2, 0:2 * Wo + 1:2, :]   # (B, Ho+1, Wo+1, C) even/even
    pb = x[:, 0:2 * Ho + 1:2, 1:2 * Wo:2, :]       # (B, Ho+1, Wo,   C) even/odd
    pc = x[:, 1:2 * Ho:2, 0:2 * Wo + 1:2, :]       # (B, Ho,   Wo+1, C) odd /even
    pd = x[:, 1:2 * Ho:2, 1:2 * Wo:2, :]           # (B, Ho,   Wo,   C) odd /odd

    # Weights: OIHW -> HWIO -> per-kw (3, 3*Cin, Cout), K stacked kh-major.
    w_hwio = jnp.transpose(weight_oihw, (2, 3, 1, 0)).astype(x.dtype)
    w_kw = jnp.transpose(w_hwio, (1, 0, 2, 3)).reshape(3, 3 * C, C)
    bias2 = bias.astype(jnp.float32).reshape(1, C)

    # ---- generation-aware tile / VMEM sizing -------------------------------
    itemsize = jnp.dtype(x.dtype).itemsize
    vmem_cap = _tpu_vmem_capacity_bytes()
    vmem_limit = int(min(vmem_cap * 3 // 4, 100 * 1024 * 1024))  # 48MiB v7x, 96MiB v5e/v6e
    target_rows = 512 if vmem_cap <= 64 * 1024 * 1024 else 2048

    if row_tile is None:
        TH = _largest_divisor_leq(Ho, max(1, target_rows // max(1, Wo)))
        # Crude per-step footprint (blocks + in-kernel temporaries); keep it
        # comfortably inside the scoped-VMEM budget.
        while TH > 1 and 28 * TH * Wo * C * itemsize > vmem_limit // 2:
            TH = _largest_divisor_leq(Ho, TH - 1)
        # v7x: make sure the parallel grid has >= 2 steps when B == 1 so both
        # TensorCores get work.
        if B == 1 and Ho // TH < 2 and Ho >= 2:
            TH = _largest_divisor_leq(Ho, Ho // 2)
    else:
        if Ho % row_tile != 0:
            raise ValueError("row_tile must divide the output height")
        TH = row_tile

    grid = (B, Ho // TH)

    kernel = functools.partial(
        _conv3x3s2_kernel,
        precision=(jax.lax.Precision.HIGHEST
                   if x.dtype == jnp.float32 else jax.lax.Precision.DEFAULT))

    flops = 2 * B * Ho * Wo * 9 * C * C
    bytes_accessed = int(itemsize * (B * (2 * Ho + 1) * (2 * Wo + 1) * C
                                     + B * Ho * Wo * C
                                     + 9 * C * C) + 4 * C)

    out_nhwc = pl.pallas_call(
        kernel,
        out_shape=jax.ShapeDtypeStruct((B, Ho, Wo, C), x_nchw.dtype),
        grid_spec=pltpu.PrefetchScalarGridSpec(
            num_scalar_prefetch=0,
            grid=grid,
            in_specs=[
                pl.BlockSpec((1, TH, Wo + 1, C), lambda b, i: (b, i, 0, 0)),            # A main
                pl.BlockSpec((1, 1, Wo + 1, C), lambda b, i: (b, (i + 1) * TH, 0, 0)),  # A halo row
                pl.BlockSpec((1, TH, Wo, C), lambda b, i: (b, i, 0, 0)),                # B main
                pl.BlockSpec((1, 1, Wo, C), lambda b, i: (b, (i + 1) * TH, 0, 0)),      # B halo row
                pl.BlockSpec((1, TH, Wo + 1, C), lambda b, i: (b, i, 0, 0)),            # C (odd rows)
                pl.BlockSpec((1, TH, Wo, C), lambda b, i: (b, i, 0, 0)),                # D (odd rows)
                pl.BlockSpec((3, 3 * C, C), lambda b, i: (0, 0, 0)),                    # weights
                pl.BlockSpec((1, C), lambda b, i: (0, 0)),                              # bias
            ],
            out_specs=pl.BlockSpec((1, TH, Wo, C), lambda b, i: (b, i, 0, 0)),
        ),
        compiler_params=pltpu.CompilerParams(
            dimension_semantics=("parallel", "parallel"),
            vmem_limit_bytes=vmem_limit,
        ),
        cost_estimate=pl.CostEstimate(
            flops=flops, transcendentals=0, bytes_accessed=bytes_accessed),
    )(pa, pa, pb, pb, pc, pd, w_kw, bias2)

    # TODO(synk): drop this transpose if the surrounding model is NHWC.
    return jnp.transpose(out_nhwc, (0, 3, 1, 2))


if __name__ == "__main__":
    key = jax.random.PRNGKey(0)
    k_x, k_w, k_b, k_x2, k_w2, k_b2 = jax.random.split(key, 6)

    def reference(x, w, b):
        out = jax.lax.conv_general_dilated(
            x, w, window_strides=(2, 2), padding=((0, 1), (0, 1)),
            dimension_numbers=("NCHW", "OIHW", "NCHW"),
            precision=jax.lax.Precision.HIGHEST)
        return out + b.reshape(1, -1, 1, 1)

    def check(B, C, H, W, kx, kw, kb):
        x = jax.random.normal(kx, (B, C, H, W), jnp.float32)
        fan_in = C * 9
        bound = 1.0 / math.sqrt(fan_in)
        w = jax.random.uniform(kw, (C, C, 3, 3), jnp.float32, -bound, bound)
        b = jax.random.uniform(kb, (C,), jnp.float32, -bound, bound)
        out = jax.block_until_ready(jax.jit(chameleon_conv_downsample)(x, w, b))
        ref = reference(x, w, b)
        assert out.shape == ref.shape, (out.shape, ref.shape)
        err = float(jnp.max(jnp.abs(out - ref)))
        assert err < 1e-4, f"max abs err {err}"

    # Primary small config (module at batch=2, channels=4, 16x16 spatial).
    check(2, 4, 16, 16, k_x, k_w, k_b)
    # Odd spatial size + batch 1 exercises the halo / tile-divisor paths.
    check(1, 5, 15, 15, k_x2, k_w2, k_b2)

    print("KERNEL_OK")
</pallas_src>

<mosaic_0001>
module attributes {stable_mosaic.version = 11 : i64} {
  func.func @_conv3x3s2_kernel(%arg0: i32, %arg1: i32, %arg2: memref<1x8x9x4xf32, #tpu.memory_space<vmem>>, %arg3: memref<1x1x9x4xf32, #tpu.memory_space<vmem>>, %arg4: memref<1x8x8x4xf32, #tpu.memory_space<vmem>>, %arg5: memref<1x1x8x4xf32, #tpu.memory_space<vmem>>, %arg6: memref<1x8x9x4xf32, #tpu.memory_space<vmem>>, %arg7: memref<1x8x8x4xf32, #tpu.memory_space<vmem>>, %arg8: memref<3x12x4xf32, #tpu.memory_space<vmem>>, %arg9: memref<1x4xf32, #tpu.memory_space<vmem>>, %arg10: memref<1x8x8x4xf32, #tpu.memory_space<vmem>>) attributes {dimension_semantics = [#tpu.dimension_semantics<parallel>, #tpu.dimension_semantics<parallel>], iteration_bounds = array<i64: 2, 1>, scalar_prefetch = 0 : i64, scratch_operands = 0 : i64, tpu.core_type = #tpu.core_type<tc>, window_params = [{transform_indices = @transform_0, window_bounds = array<i64: 1, 8, 9, 4>}, {transform_indices = @transform_1, window_bounds = array<i64: 1, 1, 9, 4>}, {transform_indices = @transform_2, window_bounds = array<i64: 1, 8, 8, 4>}, {transform_indices = @transform_3, window_bounds = array<i64: 1, 1, 8, 4>}, {transform_indices = @transform_4, window_bounds = array<i64: 1, 8, 9, 4>}, {transform_indices = @transform_5, window_bounds = array<i64: 1, 8, 8, 4>}, {pipeline_mode = #tpu.pipeline_mode<synchronous>, transform_indices = @transform_6, window_bounds = array<i64: 3, 12, 4>}, {pipeline_mode = #tpu.pipeline_mode<synchronous>, transform_indices = @transform_7, window_bounds = array<i64: 1, 4>}, {transform_indices = @transform_8, window_bounds = array<i64: 1, 8, 8, 4>}]} {
    %c0 = arith.constant 0 : index
    %c0_0 = arith.constant 0 : index
    %c0_1 = arith.constant 0 : index
    %c0_2 = arith.constant 0 : index
    %0 = vector.load %arg2[%c0, %c0_0, %c0_1, %c0_2] : memref<1x8x9x4xf32, #tpu.memory_space<vmem>>, vector<1x8x9x4xf32>
    %1 = vector.shape_cast %0 : vector<1x8x9x4xf32> to vector<8x9x4xf32>
    %c0_3 = arith.constant 0 : index
    %c0_4 = arith.constant 0 : index
    %c0_5 = arith.constant 0 : index
    %c0_6 = arith.constant 0 : index
    %2 = vector.load %arg3[%c0_3, %c0_4, %c0_5, %c0_6] : memref<1x1x9x4xf32, #tpu.memory_space<vmem>>, vector<1x1x9x4xf32>
    %3 = vector.shape_cast %2 : vector<1x1x9x4xf32> to vector<1x9x4xf32>
    %c0_7 = arith.constant 0 : index
    %c0_8 = arith.constant 0 : index
    %c0_9 = arith.constant 0 : index
    %c0_10 = arith.constant 0 : index
    %4 = vector.load %arg4[%c0_7, %c0_8, %c0_9, %c0_10] : memref<1x8x8x4xf32, #tpu.memory_space<vmem>>, vector<1x8x8x4xf32>
    %5 = vector.shape_cast %4 : vector<1x8x8x4xf32> to vector<8x8x4xf32>
    %c0_11 = arith.constant 0 : index
    %c0_12 = arith.constant 0 : index
    %c0_13 = arith.constant 0 : index
    %c0_14 = arith.constant 0 : index
    %6 = vector.load %arg5[%c0_11, %c0_12, %c0_13, %c0_14] : memref<1x1x8x4xf32, #tpu.memory_space<vmem>>, vector<1x1x8x4xf32>
    %7 = vector.shape_cast %6 : vector<1x1x8x4xf32> to vector<1x8x4xf32>
    %c0_15 = arith.constant 0 : index
    %c0_16 = arith.constant 0 : index
    %c0_17 = arith.constant 0 : index
    %c0_18 = arith.constant 0 : index
    %8 = vector.load %arg6[%c0_15, %c0_16, %c0_17, %c0_18] : memref<1x8x9x4xf32, #tpu.memory_space<vmem>>, vector<1x8x9x4xf32>
    %9 = vector.shape_cast %8 : vector<1x8x9x4xf32> to vector<8x9x4xf32>
    %c0_19 = arith.constant 0 : index
    %c0_20 = arith.constant 0 : index
    %c0_21 = arith.constant 0 : index
    %c0_22 = arith.constant 0 : index
    %10 = vector.load %arg7[%c0_19, %c0_20, %c0_21, %c0_22] : memref<1x8x8x4xf32, #tpu.memory_space<vmem>>, vector<1x8x8x4xf32>
    %11 = vector.shape_cast %10 : vector<1x8x8x4xf32> to vector<8x8x4xf32>
    %c0_23 = arith.constant 0 : index
    %c0_24 = arith.constant 0 : index
    %c0_25 = arith.constant 0 : index
    %12 = vector.load %arg8[%c0_23, %c0_24, %c0_25] : memref<3x12x4xf32, #tpu.memory_space<vmem>>, vector<3x12x4xf32>
    %c0_26 = arith.constant 0 : index
    %c0_27 = arith.constant 0 : index
    %13 = vector.load %arg9[%c0_26, %c0_27] : memref<1x4xf32, #tpu.memory_space<vmem>>, vector<1x4xf32>
    %14 = vector.extract_strided_slice %1 {offsets = [1, 0, 0], sizes = [7, 9, 4], strides = [1, 1, 1]} : vector<8x9x4xf32> to vector<7x9x4xf32>
    %15 = tpu.concatenate %14, %3 in 0 : vector<7x9x4xf32>, vector<1x9x4xf32> -> vector<8x9x4xf32>
    %16 = vector.extract_strided_slice %5 {offsets = [1, 0, 0], sizes = [7, 8, 4], strides = [1, 1, 1]} : vector<8x8x4xf32> to vector<7x8x4xf32>
    %17 = tpu.concatenate %16, %7 in 0 : vector<7x8x4xf32>, vector<1x8x4xf32> -> vector<8x8x4xf32>
    %18 = vector.extract_strided_slice %1 {offsets = [0, 0, 0], sizes = [8, 8, 4], strides = [1, 1, 1]} : vector<8x9x4xf32> to vector<8x8x4xf32>
    %19 = vector.extract_strided_slice %9 {offsets = [0, 0, 0], sizes = [8, 8, 4], strides = [1, 1, 1]} : vector<8x9x4xf32> to vector<8x8x4xf32>
    %20 = vector.extract_strided_slice %15 {offsets = [0, 0, 0], sizes = [8, 8, 4], strides = [1, 1, 1]} : vector<8x9x4xf32> to vector<8x8x4xf32>
    %21 = tpu.concatenate %18, %19, %20 in 2 : vector<8x8x4xf32>, vector<8x8x4xf32>, vector<8x8x4xf32> -> vector<8x8x12xf32>
    %22 = tpu.concatenate %5, %11, %17 in 2 : vector<8x8x4xf32>, vector<8x8x4xf32>, vector<8x8x4xf32> -> vector<8x8x12xf32>
    %23 = vector.extract_strided_slice %1 {offsets = [0, 1, 0], sizes = [8, 8, 4], strides = [1, 1, 1]} : vector<8x9x4xf32> to vector<8x8x4xf32>
    %24 = vector.extract_strided_slice %9 {offsets = [0, 1, 0], sizes = [8, 8, 4], strides = [1, 1, 1]} : vector<8x9x4xf32> to vector<8x8x4xf32>
    %25 = vector.extract_strided_slice %15 {offsets = [0, 1, 0], sizes = [8, 8, 4], strides = [1, 1, 1]} : vector<8x9x4xf32> to vector<8x8x4xf32>
    %26 = tpu.concatenate %23, %24, %25 in 2 : vector<8x8x4xf32>, vector<8x8x4xf32>, vector<8x8x4xf32> -> vector<8x8x12xf32>
    %27 = vector.shape_cast %21 : vector<8x8x12xf32> to vector<64x12xf32>
    %28 = vector.extract_strided_slice %12 {offsets = [0, 0, 0], sizes = [1, 12, 4], strides = [1, 1, 1]} : vector<3x12x4xf32> to vector<1x12x4xf32>
    %29 = vector.shape_cast %28 : vector<1x12x4xf32> to vector<12x4xf32>
    %cst = arith.constant dense<0.000000e+00> : vector<64x4xf32>
    %30 = tpu.matmul %27, %29, %cst {dimension_numbers = #tpu.dot_dimension_numbers<[1], [0], [0], [1], [0, 0, 1, 1], [], []>, precision = #tpu.contract_precision<fp32>} : vector<64x12xf32>, vector<12x4xf32>, vector<64x4xf32> -> vector<64x4xf32>
    %31 = vector.shape_cast %22 : vector<8x8x12xf32> to vector<64x12xf32>
    %32 = vector.extract_strided_slice %12 {offsets = [1, 0, 0], sizes = [1, 12, 4], strides = [1, 1, 1]} : vector<3x12x4xf32> to vector<1x12x4xf32>
    %33 = vector.shape_cast %32 : vector<1x12x4xf32> to vector<12x4xf32>
    %cst_28 = arith.constant dense<0.000000e+00> : vector<64x4xf32>
    %34 = tpu.matmul %31, %33, %cst_28 {dimension_numbers = #tpu.dot_dimension_numbers<[1], [0], [0], [1], [0, 0, 1, 1], [], []>, precision = #tpu.contract_precision<fp32>} : vector<64x12xf32>, vector<12x4xf32>, vector<64x4xf32> -> vector<64x4xf32>
    %35 = arith.addf %30, %34 : vector<64x4xf32>
    %36 = vector.shape_cast %26 : vector<8x8x12xf32> to vector<64x12xf32>
    %37 = vector.extract_strided_slice %12 {offsets = [2, 0, 0], sizes = [1, 12, 4], strides = [1, 1, 1]} : vector<3x12x4xf32> to vector<1x12x4xf32>
    %38 = vector.shape_cast %37 : vector<1x12x4xf32> to vector<12x4xf32>
    %cst_29 = arith.constant dense<0.000000e+00> : vector<64x4xf32>
    %39 = tpu.matmul %36, %38, %cst_29 {dimension_numbers = #tpu.dot_dimension_numbers<[1], [0], [0], [1], [0, 0, 1, 1], [], []>, precision = #tpu.contract_precision<fp32>} : vector<64x12xf32>, vector<12x4xf32>, vector<64x4xf32> -> vector<64x4xf32>
    %40 = arith.addf %35, %39 : vector<64x4xf32>
    %41 = vector.broadcast %13 : vector<1x4xf32> to vector<64x4xf32>
    %42 = arith.addf %40, %41 : vector<64x4xf32>
    %43 = vector.shape_cast %42 : vector<64x4xf32> to vector<1x8x8x4xf32>
    %c0_30 = arith.constant 0 : index
    %c0_31 = arith.constant 0 : index
    %c0_32 = arith.constant 0 : index
    %c0_33 = arith.constant 0 : index
    %44 = vector.load %arg10[%c0_30, %c0_31, %c0_32, %c0_33] : memref<1x8x8x4xf32, #tpu.memory_space<vmem>>, vector<1x8x8x4xf32>
    tpu.vector_store %arg10[%c0_30, %c0_31, %c0_32, %c0_33], %43 {strides = array<i32>} : memref<1x8x8x4xf32, #tpu.memory_space<vmem>>, vector<1x8x8x4xf32>,
    return
  }
  func.func @transform_0(%arg0: i32, %arg1: i32) -> (i32, i32, i32, i32) {
    %c0_i32 = arith.constant 0 : i32
    %c0_i32_0 = arith.constant 0 : i32
    %c0_i32_1 = arith.constant 0 : i32
    return %arg0, %arg1, %c0_i32, %c0_i32_0 : i32, i32, i32, i32
  }
  func.func @transform_1(%arg0: i32, %arg1: i32) -> (i32, i32, i32, i32) {
    %c1_i32 = arith.constant 1 : i32
    %0 = arith.addi %arg1, %c1_i32 : i32
    %c8_i32 = arith.constant 8 : i32
    %1 = arith.muli %0, %c8_i32 : i32
    %c0_i32 = arith.constant 0 : i32
    %c0_i32_0 = arith.constant 0 : i32
    %c0_i32_1 = arith.constant 0 : i32
    return %arg0, %1, %c0_i32, %c0_i32_0 : i32, i32, i32, i32
  }
  func.func @transform_2(%arg0: i32, %arg1: i32) -> (i32, i32, i32, i32) {
    %c0_i32 = arith.constant 0 : i32
    %c0_i32_0 = arith.constant 0 : i32
    %c0_i32_1 = arith.constant 0 : i32
    return %arg0, %arg1, %c0_i32, %c0_i32_0 : i32, i32, i32, i32
  }
  func.func @transform_3(%arg0: i32, %arg1: i32) -> (i32, i32, i32, i32) {
    %c1_i32 = arith.constant 1 : i32
    %0 = arith.addi %arg1, %c1_i32 : i32
    %c8_i32 = arith.constant 8 : i32
    %1 = arith.muli %0, %c8_i32 : i32
    %c0_i32 = arith.constant 0 : i32
    %c0_i32_0 = arith.constant 0 : i32
    %c0_i32_1 = arith.constant 0 : i32
    return %arg0, %1, %c0_i32, %c0_i32_0 : i32, i32, i32, i32
  }
  func.func @transform_4(%arg0: i32, %arg1: i32) -> (i32, i32, i32, i32) {
    %c0_i32 = arith.constant 0 : i32
    %c0_i32_0 = arith.constant 0 : i32
    %c0_i32_1 = arith.constant 0 : i32
    return %arg0, %arg1, %c0_i32, %c0_i32_0 : i32, i32, i32, i32
  }
  func.func @transform_5(%arg0: i32, %arg1: i32) -> (i32, i32, i32, i32) {
    %c0_i32 = arith.constant 0 : i32
    %c0_i32_0 = arith.constant 0 : i32
    %c0_i32_1 = arith.constant 0 : i32
    return %arg0, %arg1, %c0_i32, %c0_i32_0 : i32, i32, i32, i32
  }
  func.func @transform_6(%arg0: i32, %arg1: i32) -> (i32, i32, i32) {
    %c0_i32 = arith.constant 0 : i32
    %c0_i32_0 = arith.constant 0 : i32
    %c0_i32_1 = arith.constant 0 : i32
    %c0_i32_2 = arith.constant 0 : i32
    return %c0_i32, %c0_i32_0, %c0_i32_1 : i32, i32, i32
  }
  func.func @transform_7(%arg0: i32, %arg1: i32) -> (i32, i32) {
    %c0_i32 = arith.constant 0 : i32
    %c0_i32_0 = arith.constant 0 : i32
    %c0_i32_1 = arith.constant 0 : i32
    return %c0_i32, %c0_i32_0 : i32, i32
  }
  func.func @transform_8(%arg0: i32, %arg1: i32) -> (i32, i32, i32, i32) {
    %c0_i32 = arith.constant 0 : i32
    %c0_i32_0 = arith.constant 0 : i32
    %c0_i32_1 = arith.constant 0 : i32
    return %arg0, %arg1, %c0_i32, %c0_i32_0 : i32, i32, i32, i32
  }
}

</mosaic_0001>

<llo_original>
// kernel: chameleon_conv_downsample.1
$region0: #{chameleon_conv_downsample.1}
  #allocation0 [shape = 'u32[]', space=smem, size = 0x4, offset = 0x4, fixed_abs, tag = 'smem constant byte address 0x4 - core index']
  #allocation1 [shape = 'u32[72,128]{1,0:T(1,128)}', space=vmem, size = 0x9000, scoped, tag = 'internal scratch']
  %s0 = inlined_call_operand.vmem [shape: f32[2,9,9,4], index: 0, kind: input, shape index: {}, may-alias: {0,1}]
  %s1 = inlined_call_operand.vmem [shape: f32[2,9,9,4], index: 1, kind: input, shape index: {}, may-alias: {0,1}]
  %s2 = inlined_call_operand.vmem [shape: f32[2,9,8,4], index: 2, kind: input, shape index: {}, may-alias: {2,3}]
  %s3 = inlined_call_operand.vmem [shape: f32[2,9,8,4], index: 3, kind: input, shape index: {}, may-alias: {2,3}]
  %s4 = inlined_call_operand.vmem [shape: f32[2,8,9,4], index: 4, kind: input, shape index: {}]
  %s5 = inlined_call_operand.vmem [shape: f32[2,8,8,4], index: 5, kind: input, shape index: {}]
  %s6 = inlined_call_operand.vmem [shape: f32[3,12,4], index: 6, kind: input, shape index: {}]
  %s7 = inlined_call_operand.vmem [shape: f32[1,4], index: 7, kind: input, shape index: {}]
  %s8 = inlined_call_operand.vmem [shape: f32[2,8,8,4], index: 8, kind: output, shape index: {}]
  %s9 = sld [smem:[#allocation0]]
  $region65: #{chameleon_conv_downsample.1} parent=0
    _
  %s11 = ssub.s32 1, %s9
  %s12 = scalar_select 0, %s11, %s9
  loop: start=0, step=1, limit=4
  $region2: #{chameleon_conv_downsample.1} parent=0 // loop_pre_header
    _
  $region3: #{chameleon_conv_downsample.1} parent=0 // loop_header
    %s14 = sphi 0, %s18
    %p15 = scmp.ge.s32.totalorder %s14, 4
    %s21 = sphi 0, %s33
    %s22 = sphi 0, %s29
    %s23 = sphi 0, %s21
    %s24 = sphi 0, %s22
    %s25 = sphi 0, %s23
    %s26 = sphi 0, %s24
    %s38 = sphi 0, %s40
    %s41 = sphi 0, %s38
    %s42 = sphi 0, %s41
    %s58 = sphi 0, %s42
    %s70 = sphi 0, %s72
    %s73 = sphi 0, %s70
    %s74 = sphi 0, %s73
    %s90 = sphi 0, %s74
    %s98 = sphi 0, %s100
    %s101 = sphi 0, %s98
    %s102 = sphi 0, %s101
    %s118 = sphi 0, %s102
    %s130 = sphi 0, %s132
    %s133 = sphi 0, %s130
    %s134 = sphi 0, %s133
    %s150 = sphi 0, %s134
    %s158 = sphi 0, %s160
    %s161 = sphi 0, %s158
    %s162 = sphi 0, %s161
    %s178 = sphi 0, %s162
    %s186 = sphi 0, %s188
    %s189 = sphi 0, %s186
    %s190 = sphi 0, %s189
    %s206 = sphi 0, %s190
    %s210 = sphi 0, %s210
    %s212 = sphi 0, %s210
    %s213 = sphi 0, %s212
    %s227 = sphi 0, %s213
    %s231 = sphi 0, %s231
    %s233 = sphi 0, %s231
    %s234 = sphi 0, %s233
    %s248 = sphi 0, %s234
    %s256 = sphi 0, %s258
    %s259 = sphi 0, %s256
    %s260 = sphi 0, %s259
    %s276 = sphi 0, %s260
  $region4: #{chameleon_conv_downsample.1} parent=0 // loop_header_branch
    %17 = sbr.rel (%p15) target = $region8
  $region5: #{chameleon_conv_downsample.1} parent=0 // loop_body
    %s19 = ssub.s32 %s14, 1
    %s20 = ssub.s32 %s14, 2
    %s27 = sadd.s32 1, %s22
    %p28 = scmp.ge.s32.totalorder %s27, 1
    %s29 = scalar_select %p28, 0, %s27
    %s30 = sadd.s32 1, %s21
    %s31 = scalar_select %p28, %s30, %s21
    %p32 = scmp.ge.s32.totalorder %s31, 2
    %s33 = scalar_select %p32, 0, %s31
    %s34 = ssub.s32 %s21, %s33
    %s35 = ssub.s32 %s22, %s29
    %s36 = sor.u32 %s34, %s35
    %p37 = scmp.eq.s32.totalorder %s36, 0
    %s39 = sadd.s32 %s38, 1
    %s40 = scalar_select %p37, %s38, %s39
    %p43 = pneg %p37
    %p44 = scmp.eq.s32.totalorder %s14, 1
    %p45 = por %p43, %p44
    %p46 = scmp.ne.s32.totalorder %s38, %s41
    %p47 = scmp.eq.s32.totalorder %s14, 0
    %p48 = por %p46, %p47
    %p49 = scmp.ne.s32.totalorder %s38, %s41
    %p50 = scmp.eq.s32.totalorder %s19, 1
    %p51 = por %p49, %p50
    %p52 = scmp.ne.s32.totalorder %s41, %s42
    %p53 = scmp.eq.s32.totalorder %s19, 0
    %p54 = por %p52, %p53
    %p55 = scmp.ne.s32.totalorder %s41, %s42
    %p56 = scmp.eq.s32.totalorder %s20, 1
    %p57 = por %p55, %p56
    %p59 = scmp.ne.s32.totalorder %s42, %s58
    %p60 = scmp.eq.s32.totalorder %s20, 0
    %p61 = por %p59, %p60
    %s62 = sadd.s32 %s22, 1
    %s63 = smul.u32 %s62, 8
    %s64 = sadd.s32 %s29, 1
    %s65 = smul.u32 %s64, 8
    %s66 = ssub.s32 %s21, %s33
    %s67 = ssub.s32 %s63, %s65
    %s68 = sor.u32 %s66, %s67
    %p69 = scmp.eq.s32.totalorder %s68, 0
    %s71 = sadd.s32 %s70, 1
    %s72 = scalar_select %p69, %s70, %s71
    %p75 = pneg %p69
    %p76 = scmp.eq.s32.totalorder %s14, 1
    %p77 = por %p75, %p76
    %p78 = scmp.ne.s32.totalorder %s70, %s73
    %p79 = scmp.eq.s32.totalorder %s14, 0
    %p80 = por %p78, %p79
    %p81 = scmp.ne.s32.totalorder %s70, %s73
    %p82 = scmp.eq.s32.totalorder %s19, 1
    %p83 = por %p81, %p82
    %p84 = scmp.ne.s32.totalorder %s73, %s74
    %p85 = scmp.eq.s32.totalorder %s19, 0
    %p86 = por %p84, %p85
    %p87 = scmp.ne.s32.totalorder %s73, %s74
    %p88 = scmp.eq.s32.totalorder %s20, 1
    %p89 = por %p87, %p88
    %p91 = scmp.ne.s32.totalorder %s74, %s90
    %p92 = scmp.eq.s32.totalorder %s20, 0
    %p93 = por %p91, %p92
    %s94 = ssub.s32 %s21, %s33
    %s95 = ssub.s32 %s22, %s29
    %s96 = sor.u32 %s94, %s95
    %p97 = scmp.eq.s32.totalorder %s96, 0
    %s99 = sadd.s32 %s98, 1
    %s100 = scalar_select %p97, %s98, %s99
    %p103 = pneg %p97
    %p104 = scmp.eq.s32.totalorder %s14, 1
    %p105 = por %p103, %p104
    %p106 = scmp.ne.s32.totalorder %s98, %s101
    %p107 = scmp.eq.s32.totalorder %s14, 0
    %p108 = por %p106, %p107
    %p109 = scmp.ne.s32.totalorder %s98, %s101
    %p110 = scmp.eq.s32.totalorder %s19, 1
    %p111 = por %p109, %p110
    %p112 = scmp.ne.s32.totalorder %s101, %s102
    %p113 = scmp.eq.s32.totalorder %s19, 0
    %p114 = por %p112, %p113
    %p115 = scmp.ne.s32.totalorder %s101, %s102
    %p116 = scmp.eq.s32.totalorder %s20, 1
    %p117 = por %p115, %p116
    %p119 = scmp.ne.s32.totalorder %s102, %s118
    %p120 = scmp.eq.s32.totalorder %s20, 0
    %p121 = por %p119, %p120
    %s122 = sadd.s32 %s22, 1
    %s123 = smul.u32 %s122, 8
    %s124 = sadd.s32 %s29, 1
    %s125 = smul.u32 %s124, 8
    %s126 = ssub.s32 %s21, %s33
    %s127 = ssub.s32 %s123, %s125
    %s128 = sor.u32 %s126, %s127
    %p129 = scmp.eq.s32.totalorder %s128, 0
    %s131 = sadd.s32 %s130, 1
    %s132 = scalar_select %p129, %s130, %s131
    %p135 = pneg %p129
    %p136 = scmp.eq.s32.totalorder %s14, 1
    %p137 = por %p135, %p136
    %p138 = scmp.ne.s32.totalorder %s130, %s133
    %p139 = scmp.eq.s32.totalorder %s14, 0
    %p140 = por %p138, %p139
    %p141 = scmp.ne.s32.totalorder %s130, %s133
    %p142 = scmp.eq.s32.totalorder %s19, 1
    %p143 = por %p141, %p142
    %p144 = scmp.ne.s32.totalorder %s133, %s134
    %p145 = scmp.eq.s32.totalorder %s19, 0
    %p146 = por %p144, %p145
    %p147 = scmp.ne.s32.totalorder %s133, %s134
    %p148 = scmp.eq.s32.totalorder %s20, 1
    %p149 = por %p147, %p148
    %p151 = scmp.ne.s32.totalorder %s134, %s150
    %p152 = scmp.eq.s32.totalorder %s20, 0
    %p153 = por %p151, %p152
    %s154 = ssub.s32 %s21, %s33
    %s155 = ssub.s32 %s22, %s29
    %s156 = sor.u32 %s154, %s155
    %p157 = scmp.eq.s32.totalorder %s156, 0
    %s159 = sadd.s32 %s158, 1
    %s160 = scalar_select %p157, %s158, %s159
    %p163 = pneg %p157
    %p164 = scmp.eq.s32.totalorder %s14, 1
    %p165 = por %p163, %p164
    %p166 = scmp.ne.s32.totalorder %s158, %s161
    %p167 = scmp.eq.s32.totalorder %s14, 0
    %p168 = por %p166, %p167
    %p169 = scmp.ne.s32.totalorder %s158, %s161
    %p170 = scmp.eq.s32.totalorder %s19, 1
    %p171 = por %p169, %p170
    %p172 = scmp.ne.s32.totalorder %s161, %s162
    %p173 = scmp.eq.s32.totalorder %s19, 0
    %p174 = por %p172, %p173
    %p175 = scmp.ne.s32.totalorder %s161, %s162
    %p176 = scmp.eq.s32.totalorder %s20, 1
    %p177 = por %p175, %p176
    %p179 = scmp.ne.s32.totalorder %s162, %s178
    %p180 = scmp.eq.s32.totalorder %s20, 0
    %p181 = por %p179, %p180
    %s182 = ssub.s32 %s21, %s33
    %s183 = ssub.s32 %s22, %s29
    %s184 = sor.u32 %s182, %s183
    %p185 = scmp.eq.s32.totalorder %s184, 0
    %s187 = sadd.s32 %s186, 1
    %s188 = scalar_select %p185, %s186, %s187
    %p191 = pneg %p185
    %p192 = scmp.eq.s32.totalorder %s14, 1
    %p193 = por %p191, %p192
    %p194 = scmp.ne.s32.totalorder %s186, %s189
    %p195 = scmp.eq.s32.totalorder %s14, 0
    %p196 = por %p194, %p195
    %p197 = scmp.ne.s32.totalorder %s186, %s189
    %p198 = scmp.eq.s32.totalorder %s19, 1
    %p199 = por %p197, %p198
    %p200 = scmp.ne.s32.totalorder %s189, %s190
    %p201 = scmp.eq.s32.totalorder %s19, 0
    %p202 = por %p200, %p201
    %p203 = scmp.ne.s32.totalorder %s189, %s190
    %p204 = scmp.eq.s32.totalorder %s20, 1
    %p205 = por %p203, %p204
    %p207 = scmp.ne.s32.totalorder %s190, %s206
    %p208 = scmp.eq.s32.totalorder %s20, 0
    %p209 = por %p207, %p208
    %s211 = sadd.s32 %s210, 1
    %p214 = scmp.eq.s32.totalorder %s14, 1
    %p215 = scmp.ne.s32.totalorder %s210, %s212
    %p216 = scmp.eq.s32.totalorder %s14, 0
    %p217 = por %p215, %p216
    %p218 = scmp.ne.s32.totalorder %s210, %s212
    %p219 = scmp.eq.s32.totalorder %s19, 1
    %p220 = por %p218, %p219
    %p221 = scmp.ne.s32.totalorder %s212, %s213
    %p222 = scmp.eq.s32.totalorder %s19, 0
    %p223 = por %p221, %p222
    %p224 = scmp.ne.s32.totalorder %s212, %s213
    %p225 = scmp.eq.s32.totalorder %s20, 1
    %p226 = por %p224, %p225
    %p228 = scmp.ne.s32.totalorder %s213, %s227
    %p229 = scmp.eq.s32.totalorder %s20, 0
    %p230 = por %p228, %p229
    %s232 = sadd.s32 %s231, 1
    %p235 = scmp.eq.s32.totalorder %s14, 1
    %p236 = scmp.ne.s32.totalorder %s231, %s233
    %p237 = scmp.eq.s32.totalorder %s14, 0
    %p238 = por %p236, %p237
    %p239 = scmp.ne.s32.totalorder %s231, %s233
    %p240 = scmp.eq.s32.totalorder %s19, 1
    %p241 = por %p239, %p240
    %p242 = scmp.ne.s32.totalorder %s233, %s234
    %p243 = scmp.eq.s32.totalorder %s19, 0
    %p244 = por %p242, %p243
    %p245 = scmp.ne.s32.totalorder %s233, %s234
    %p246 = scmp.eq.s32.totalorder %s20, 1
    %p247 = por %p245, %p246
    %p249 = scmp.ne.s32.totalorder %s234, %s248
    %p250 = scmp.eq.s32.totalorder %s20, 0
    %p251 = por %p249, %p250
    %s252 = ssub.s32 %s21, %s33
    %s253 = ssub.s32 %s22, %s29
    %s254 = sor.u32 %s252, %s253
    %p255 = scmp.eq.s32.totalorder %s254, 0
    %s257 = sadd.s32 %s256, 1
    %s258 = scalar_select %p255, %s256, %s257
    %p261 = pneg %p255
    %p262 = scmp.eq.s32.totalorder %s14, 1
    %p263 = por %p261, %p262
    %p264 = scmp.ne.s32.totalorder %s256, %s259
    %p265 = scmp.eq.s32.totalorder %s14, 0
    %p266 = por %p264, %p265
    %p267 = scmp.ne.s32.totalorder %s256, %s259
    %p268 = scmp.eq.s32.totalorder %s19, 1
    %p269 = por %p267, %p268
    %p270 = scmp.ne.s32.totalorder %s259, %s260
    %p271 = scmp.eq.s32.totalorder %s19, 0
    %p272 = por %p270, %p271
    %p273 = scmp.ne.s32.totalorder %s259, %s260
    %p274 = scmp.eq.s32.totalorder %s20, 1
    %p275 = por %p273, %p274
    %p277 = scmp.ne.s32.totalorder %s260, %s276
    %p278 = scmp.eq.s32.totalorder %s20, 0
    %p279 = por %p277, %p278
    %p280 = scmp.le.s32.totalorder 1, %s14
    %p281 = scmp.lt.s32.totalorder %s14, 3
    %p282 = pnand %p280, %p281
    %p283 = pneg %p282
    // Predicated region
    $region9: #{chameleon_conv_downsample.1} parent=5 // pred_check
      _
    $region10: #{chameleon_conv_downsample.1} parent=5 // pred_check_branch
      %285 = sbr.rel (%p282) target = $region12
    $region11: #{chameleon_conv_downsample.1} parent=5 // pred_region
      %s286 = ssub.s32 %s14, 1
      // Predicated region
      $region13: #{chameleon_conv_downsample.1} parent=11 // pred_check
        %p287 = pneg %p223
      $region14: #{chameleon_conv_downsample.1} parent=11 // pred_check_branch
        %289 = sbr.rel (%p287) target = $region16
      $region15: #{chameleon_conv_downsample.1} parent=11 // pred_region
        _
      $region16: #{chameleon_conv_downsample.1} parent=11 // pred_fallthru
        _
      // Predicated region
      $region17: #{chameleon_conv_downsample.1} parent=11 // pred_check
        %p290 = pneg %p244
      $region18: #{chameleon_conv_downsample.1} parent=11 // pred_check_branch
        %292 = sbr.rel (%p290) target = $region20
      $region19: #{chameleon_conv_downsample.1} parent=11 // pred_region
        _
      $region20: #{chameleon_conv_downsample.1} parent=11 // pred_fallthru
        _
    $region12: #{chameleon_conv_downsample.1} parent=5 // pred_fallthru
      _
    %p293 = scmp.lt.s32.totalorder %s14, 2
    // Predicated region
    $region21: #{chameleon_conv_downsample.1} parent=5 // pred_check
      %p294 = pneg %p293
    $region22: #{chameleon_conv_downsample.1} parent=5 // pred_check_branch
      %296 = sbr.rel (%p294) target = $region24
    $region23: #{chameleon_conv_downsample.1} parent=5 // pred_region
      // Predicated region
      $region25: #{chameleon_conv_downsample.1} parent=23 // pred_check
        %p297 = pneg %p48
      $region26: #{chameleon_conv_downsample.1} parent=23 // pred_check_branch
        %299 = sbr.rel (%p297) target = $region28
      $region27: #{chameleon_conv_downsample.1} parent=23 // pred_region
        %s300 = smul.u32 8, %s22
        %s301 = ssub.s32 9, %s300
        %p302 = scmp.lt.s32.totalorder %s301, 8
        %s303 = scalar_select %p302, %s301, 8
        %s304 = smul.u32 8, %s303
        %s305 = smul.u32 %s304, 2
        %p306 = scmp.lt.s32.totalorder %s21, 1
        %s307 = scalar_select %p306, %s21, 1
        %p308 = scmp.lt.s32.totalorder %s300, 8
        %s309 = scalar_select %p308, %s300, 8
        %s310 = smul.addr %s309, 2
        %s311 = smul.addr %s307, 18
        %s312 = sadd.s32 %s310, %s311
        %s313 = smul.addr %s312, 8
        %s314 = scalar_lea.vmem %s0, %s313
        %s315 = smul.u32 8, %s22
        %s316 = ssub.s32 9, %s315
        %p317 = scmp.lt.s32.totalorder %s316, 8
        %s318 = scalar_select %p317, %s316, 8
        %s319 = smul.u32 8, %s318
        %s320 = smul.u32 %s319, 2
      $region28: #{chameleon_conv_downsample.1} parent=23 // pred_fallthru
        _
      // Predicated region
      $region29: #{chameleon_conv_downsample.1} parent=23 // pred_check
        %p321 = pneg %p80
      $region30: #{chameleon_conv_downsample.1} parent=23 // pred_check_branch
        %323 = sbr.rel (%p321) target = $region32
      $region31: #{chameleon_conv_downsample.1} parent=23 // pred_region
        %s324 = sadd.s32 %s22, 1
        %s325 = smul.u32 %s324, 8
        %p326 = scmp.lt.s32.totalorder %s21, 1
        %s327 = scalar_select %p326, %s21, 1
        %p328 = scmp.lt.s32.totalorder %s325, 8
        %s329 = scalar_select %p328, %s325, 8
        %s330 = smul.addr %s329, 2
        %s331 = smul.addr %s327, 18
        %s332 = sadd.s32 %s330, %s331
        %s333 = smul.addr %s332, 8
        %s334 = scalar_lea.vmem %s1, %s333
        %s335 = sadd.s32 %s22, 1
        %s336 = smul.u32 %s335, 8
      $region32: #{chameleon_conv_downsample.1} parent=23 // pred_fallthru
        _
      // Predicated region
      $region33: #{chameleon_conv_downsample.1} parent=23 // pred_check
        %p337 = pneg %p108
      $region34: #{chameleon_conv_downsample.1} parent=23 // pred_check_branch
        %339 = sbr.rel (%p337) target = $region36
      $region35: #{chameleon_conv_downsample.1} parent=23 // pred_region
        %s340 = smul.u32 8, %s22
        %s341 = ssub.s32 9, %s340
        %p342 = scmp.lt.s32.totalorder %s341, 8
        %s343 = scalar_select %p342, %s341, 8
        %s344 = smul.u32 8, %s343
        %p345 = scmp.lt.s32.totalorder %s21, 1
        %s346 = scalar_select %p345, %s21, 1
        %p347 = scmp.lt.s32.totalorder %s340, 8
        %s348 = scalar_select %p347, %s340, 8
        %s349 = smul.addr %s346, 9
        %s350 = sadd.s32 %s348, %s349
        %s351 = smul.addr %s350, 8
        %s352 = scalar_lea.vmem %s2, %s351
        %s353 = smul.u32 8, %s22
        %s354 = ssub.s32 9, %s353
        %p355 = scmp.lt.s32.totalorder %s354, 8
        %s356 = scalar_select %p355, %s354, 8
        %s357 = smul.u32 8, %s356
      $region36: #{chameleon_conv_downsample.1} parent=23 // pred_fallthru
        _
      // Predicated region
      $region37: #{chameleon_conv_downsample.1} parent=23 // pred_check
        %p358 = pneg %p140
      $region38: #{chameleon_conv_downsample.1} parent=23 // pred_check_branch
        %360 = sbr.rel (%p358) target = $region40
      $region39: #{chameleon_conv_downsample.1} parent=23 // pred_region
        %s361 = sadd.s32 %s22, 1
        %s362 = smul.u32 %s361, 8
        %p363 = scmp.lt.s32.totalorder %s21, 1
        %s364 = scalar_select %p363, %s21, 1
        %p365 = scmp.lt.s32.totalorder %s362, 8
        %s366 = scalar_select %p365, %s362, 8
        %s367 = smul.addr %s364, 9
        %s368 = sadd.s32 %s366, %s367
        %s369 = smul.addr %s368, 8
        %s370 = scalar_lea.vmem %s3, %s369
        %s371 = sadd.s32 %s22, 1
        %s372 = smul.u32 %s371, 8
      $region40: #{chameleon_conv_downsample.1} parent=23 // pred_fallthru
        _
      // Predicated region
      $region41: #{chameleon_conv_downsample.1} parent=23 // pred_check
        %p373 = pneg %p168
      $region42: #{chameleon_conv_downsample.1} parent=23 // pred_check_branch
        %375 = sbr.rel (%p373) target = $region44
      $region43: #{chameleon_conv_downsample.1} parent=23 // pred_region
        %s376 = smul.u32 8, %s22
        %p377 = scmp.lt.s32.totalorder %s21, 1
        %s378 = scalar_select %p377, %s21, 1
        %p379 = scmp.lt.s32.totalorder %s376, 7
        %s380 = scalar_select %p379, %s376, 7
        %s381 = smul.addr %s380, 2
        %s382 = smul.addr %s378, 16
        %s383 = sadd.s32 %s381, %s382
        %s384 = smul.addr %s383, 8
        %s385 = scalar_lea.vmem %s4, %s384
        %s386 = smul.u32 8, %s22
      $region44: #{chameleon_conv_downsample.1} parent=23 // pred_fallthru
        _
      // Predicated region
      $region45: #{chameleon_conv_downsample.1} parent=23 // pred_check
        %p387 = pneg %p196
      $region46: #{chameleon_conv_downsample.1} parent=23 // pred_check_branch
        %389 = sbr.rel (%p387) target = $region48
      $region47: #{chameleon_conv_downsample.1} parent=23 // pred_region
        %s390 = smul.u32 8, %s22
        %p391 = scmp.lt.s32.totalorder %s21, 1
        %s392 = scalar_select %p391, %s21, 1
        %p393 = scmp.lt.s32.totalorder %s390, 7
        %s394 = scalar_select %p393, %s390, 7
        %s395 = smul.addr %s392, 8
        %s396 = sadd.s32 %s394, %s395
        %s397 = smul.addr %s396, 8
        %s398 = scalar_lea.vmem %s5, %s397
        %s399 = smul.u32 8, %s22
      $region48: #{chameleon_conv_downsample.1} parent=23 // pred_fallthru
        _
    $region24: #{chameleon_conv_downsample.1} parent=5 // pred_fallthru
      _
    %p400 = scmp.le.s32.totalorder 1, %s14
    %p401 = scmp.lt.s32.totalorder %s14, 3
    %p402 = pnand %p400, %p401
    %p403 = pneg %p402
    // Predicated region
    $region49: #{chameleon_conv_downsample.1} parent=5 // pred_check
      _
    $region50: #{chameleon_conv_downsample.1} parent=5 // pred_check_branch
      %405 = sbr.rel (%p402) target = $region52
    $region51: #{chameleon_conv_downsample.1} parent=5 // pred_region
      %s406 = ssub.s32 %s14, 1
      %s407 = smul.u32 8, %s24
      %s408 = ssub.s32 9, %s407
      %p409 = scmp.lt.s32.totalorder %s408, 8
      %s410 = scalar_select %p409, %s408, 8
      %s411 = smul.u32 8, %s410
      %s412 = smul.u32 %s411, 2
      %p413 = scmp.lt.s32.totalorder %s23, 1
      %s414 = scalar_select %p413, %s23, 1
      %p415 = scmp.lt.s32.totalorder %s407, 8
      %s416 = scalar_select %p415, %s407, 8
      %s417 = smul.addr %s416, 2
      %s418 = smul.addr %s414, 18
      %s419 = sadd.s32 %s417, %s418
      %s420 = smul.addr %s419, 8
      %s421 = scalar_lea.vmem %s0, %s420
      %p422 = pneg %p54
      %p423 = pneg %p51
      %s424 = sadd.s32 %s24, 1
      %s425 = smul.u32 %s424, 8
      %p426 = scmp.lt.s32.totalorder %s23, 1
      %s427 = scalar_select %p426, %s23, 1
      %p428 = scmp.lt.s32.totalorder %s425, 8
      %s429 = scalar_select %p428, %s425, 8
      %s430 = smul.addr %s429, 2
      %s431 = smul.addr %s427, 18
      %s432 = sadd.s32 %s430, %s431
      %s433 = smul.addr %s432, 8
      %s434 = scalar_lea.vmem %s1, %s433
      %p435 = pneg %p86
      %p436 = pneg %p83
      %s437 = smul.u32 8, %s24
      %s438 = ssub.s32 9, %s437
      %p439 = scmp.lt.s32.totalorder %s438, 8
      %s440 = scalar_select %p439, %s438, 8
      %s441 = smul.u32 8, %s440
      %p442 = scmp.lt.s32.totalorder %s23, 1
      %s443 = scalar_select %p442, %s23, 1
      %p444 = scmp.lt.s32.totalorder %s437, 8
      %s445 = scalar_select %p444, %s437, 8
      %s446 = smul.addr %s443, 9
      %s447 = sadd.s32 %s445, %s446
      %s448 = smul.addr %s447, 8
      %s449 = scalar_lea.vmem %s2, %s448
      %p450 = pneg %p114
      %p451 = pneg %p111
      %s452 = sadd.s32 %s24, 1
      %s453 = smul.u32 %s452, 8
      %p454 = scmp.lt.s32.totalorder %s23, 1
      %s455 = scalar_select %p454, %s23, 1
      %p456 = scmp.lt.s32.totalorder %s453, 8
      %s457 = scalar_select %p456, %s453, 8
      %s458 = smul.addr %s455, 9
      %s459 = sadd.s32 %s457, %s458
      %s460 = smul.addr %s459, 8
      %s461 = scalar_lea.vmem %s3, %s460
      %p462 = pneg %p146
      %p463 = pneg %p143
      %s464 = smul.u32 8, %s24
      %p465 = scmp.lt.s32.totalorder %s23, 1
      %s466 = scalar_select %p465, %s23, 1
      %p467 = scmp.lt.s32.totalorder %s464, 7
      %s468 = scalar_select %p467, %s464, 7
      %s469 = smul.addr %s468, 2
      %s470 = smul.addr %s466, 16
      %s471 = sadd.s32 %s469, %s470
      %s472 = smul.addr %s471, 8
      %s473 = scalar_lea.vmem %s4, %s472
      %p474 = pneg %p174
      %p475 = pneg %p171
      %s476 = smul.u32 8, %s24
      %p477 = scmp.lt.s32.totalorder %s23, 1
      %s478 = scalar_select %p477, %s23, 1
      %p479 = scmp.lt.s32.totalorder %s476, 7
      %s480 = scalar_select %p479, %s476, 7
      %s481 = smul.addr %s478, 8
      %s482 = sadd.s32 %s480, %s481
      %s483 = smul.addr %s482, 8
      %s484 = scalar_lea.vmem %s5, %s483
      %p485 = pneg %p202
      %p486 = pneg %p199
      %p487 = pneg %p223
      %p488 = pneg %p220
      %p489 = pneg %p244
      %p490 = pneg %p241
      %p491 = pneg %p272
      %p492 = pneg %p269
      %s493 = smul.u32 8, %s24
      %p494 = scmp.lt.s32.totalorder %s23, 1
      %s495 = scalar_select %p494, %s23, 1
      %p496 = scmp.lt.s32.totalorder %s493, 7
      %s497 = scalar_select %p496, %s493, 7
      %s498 = smul.addr %s495, 8
      %s499 = sadd.s32 %s497, %s498
      %s500 = smul.addr %s499, 8
      %s501 = scalar_lea.vmem %s8, %s500
      %s502 = smul.u32 8, %s24
      %s503 = ssub.s32 9, %s502
      %p504 = scmp.lt.s32.totalorder %s503, 8
      %s505 = scalar_select %p504, %s503, 8
      %s506 = smul.u32 8, %s505
      %s507 = smul.u32 %s506, 2
      %p508 = scmp.lt.s32.totalorder %s23, 1
      %s509 = scalar_select %p508, %s23, 1
      %p510 = scmp.lt.s32.totalorder %s502, 8
      %s511 = scalar_select %p510, %s502, 8
      %s512 = smul.addr %s511, 2
      %s513 = smul.addr %s509, 18
      %s514 = sadd.s32 %s512, %s513
      %s515 = smul.addr %s514, 8
      %s516 = scalar_lea.vmem %s0, %s515
      %s517 = smul.u32 8, %s24
      %s518 = ssub.s32 9, %s517
      %p519 = scmp.lt.s32.totalorder %s518, 8
      %s520 = scalar_select %p519, %s518, 8
      %s521 = smul.u32 8, %s520
      %s522 = smul.u32 %s521, 2
      %s523 = sadd.s32 %s24, 1
      %s524 = smul.u32 %s523, 8
      %p525 = scmp.lt.s32.totalorder %s23, 1
      %s526 = scalar_select %p525, %s23, 1
      %p527 = scmp.lt.s32.totalorder %s524, 8
      %s528 = scalar_select %p527, %s524, 8
      %s529 = smul.addr %s528, 2
      %s530 = smul.addr %s526, 18
      %s531 = sadd.s32 %s529, %s530
      %s532 = smul.addr %s531, 8
      %s533 = scalar_lea.vmem %s1, %s532
      %s534 = sadd.s32 %s24, 1
      %s535 = smul.u32 %s534, 8
      %s536 = smul.u32 8, %s24
      %s537 = ssub.s32 9, %s536
      %p538 = scmp.lt.s32.totalorder %s537, 8
      %s539 = scalar_select %p538, %s537, 8
      %s540 = smul.u32 8, %s539
      %p541 = scmp.lt.s32.totalorder %s23, 1
      %s542 = scalar_select %p541, %s23, 1
      %p543 = scmp.lt.s32.totalorder %s536, 8
      %s544 = scalar_select %p543, %s536, 8
      %s545 = smul.addr %s542, 9
      %s546 = sadd.s32 %s544, %s545
      %s547 = smul.addr %s546, 8
      %s548 = scalar_lea.vmem %s2, %s547
      %s549 = smul.u32 8, %s24
      %s550 = ssub.s32 9, %s549
      %p551 = scmp.lt.s32.totalorder %s550, 8
      %s552 = scalar_select %p551, %s550, 8
      %s553 = smul.u32 8, %s552
      %s554 = sadd.s32 %s24, 1
      %s555 = smul.u32 %s554, 8
      %p556 = scmp.lt.s32.totalorder %s23, 1
      %s557 = scalar_select %p556, %s23, 1
      %p558 = scmp.lt.s32.totalorder %s555, 8
      %s559 = scalar_select %p558, %s555, 8
      %s560 = smul.addr %s557, 9
      %s561 = sadd.s32 %s559, %s560
      %s562 = smul.addr %s561, 8
      %s563 = scalar_lea.vmem %s3, %s562
      %s564 = sadd.s32 %s24, 1
      %s565 = smul.u32 %s564, 8
      %s566 = smul.u32 8, %s24
      %p567 = scmp.lt.s32.totalorder %s23, 1
      %s568 = scalar_select %p567, %s23, 1
      %p569 = scmp.lt.s32.totalorder %s566, 7
      %s570 = scalar_select %p569, %s566, 7
      %s571 = smul.addr %s570, 2
      %s572 = smul.addr %s568, 16
      %s573 = sadd.s32 %s571, %s572
      %s574 = smul.addr %s573, 8
      %s575 = scalar_lea.vmem %s4, %s574
      %s576 = smul.u32 8, %s24
      %s577 = smul.u32 8, %s24
      %p578 = scmp.lt.s32.totalorder %s23, 1
      %s579 = scalar_select %p578, %s23, 1
      %p580 = scmp.lt.s32.totalorder %s577, 7
      %s581 = scalar_select %p580, %s577, 7
      %s582 = smul.addr %s579, 8
      %s583 = sadd.s32 %s581, %s582
      %s584 = smul.addr %s583, 8
      %s585 = scalar_lea.vmem %s5, %s584
      %s586 = smul.u32 8, %s24
      %s587 = smul.u32 8, %s24
      %p588 = scmp.lt.s32.totalorder %s23, 1
      %s589 = scalar_select %p588, %s23, 1
      %p590 = scmp.lt.s32.totalorder %s587, 7
      %s591 = scalar_select %p590, %s587, 7
      %s592 = smul.addr %s589, 8
      %s593 = sadd.s32 %s591, %s592
      %s594 = smul.addr %s593, 8
      %s595 = scalar_lea.vmem %s8, %s594
      %s596 = smul.u32 8, %s24
      %v597 = vld [vmem:[%s516] sm:$0xff]
      %v598 = vld [vmem:[%s516 + $0x8] sm:$0x1]
      %v599 = vld [vmem:[%s516 + $0x10] sm:$0xff]
      %v600 = vld [vmem:[%s516 + $0x18] sm:$0x1]
      %v601 = vld [vmem:[%s516 + $0x20] sm:$0xff]
      %v602 = vld [vmem:[%s516 + $0x28] sm:$0x1]
      %v603 = vld [vmem:[%s516 + $0x30] sm:$0xff]
      %v604 = vld [vmem:[%s516 + $0x38] sm:$0x1]
      %v605 = vld [vmem:[%s516 + $0x40] sm:$0xff]
      %v606 = vld [vmem:[%s516 + $0x48] sm:$0x1]
      %v607 = vld [vmem:[%s516 + $0x50] sm:$0xff]
      %v608 = vld [vmem:[%s516 + $0x58] sm:$0x1]
      %v609 = vld [vmem:[%s516 + $0x60] sm:$0xff]
      %v610 = vld [vmem:[%s516 + $0x68] sm:$0x1]
      %v611 = vld [vmem:[%s516 + $0x70] sm:$0xff]
      %v612 = vld [vmem:[%s516 + $0x78] sm:$0x1]
      %v613 = vld [vmem:[%s533] sm:$0xff]
      %v614 = vld [vmem:[%s533 + $0x8] sm:$0x1]
      %v615 = vld [vmem:[%s548] sm:$0xff]
      %v616 = vld [vmem:[%s548 + $0x8] sm:$0xff]
      %v617 = vld [vmem:[%s548 + $0x10] sm:$0xff]
      %v618 = vld [vmem:[%s548 + $0x18] sm:$0xff]
      %v619 = vld [vmem:[%s548 + $0x20] sm:$0xff]
      %v620 = vld [vmem:[%s548 + $0x28] sm:$0xff]
      %v621 = vld [vmem:[%s548 + $0x30] sm:$0xff]
      %v622 = vld [vmem:[%s548 + $0x38] sm:$0xff]
      %v623 = vld [vmem:[%s563] sm:$0xff]
      %v624 = vld [vmem:[%s575] sm:$0xff]
      %v625 = vld [vmem:[%s575 + $0x8] sm:$0x1]
      %v626 = vld [vmem:[%s575 + $0x10] sm:$0xff]
      %v627 = vld [vmem:[%s575 + $0x18] sm:$0x1]
      %v628 = vld [vmem:[%s575 + $0x20] sm:$0xff]
      %v629 = vld [vmem:[%s575 + $0x28] sm:$0x1]
      %v630 = vld [vmem:[%s575 + $0x30] sm:$0xff]
      %v631 = vld [vmem:[%s575 + $0x38] sm:$0x1]
      %v632 = vld [vmem:[%s575 + $0x40] sm:$0xff]
      %v633 = vld [vmem:[%s575 + $0x48] sm:$0x1]
      %v634 = vld [vmem:[%s575 + $0x50] sm:$0xff]
      %v635 = vld [vmem:[%s575 + $0x58] sm:$0x1]
      %v636 = vld [vmem:[%s575 + $0x60] sm:$0xff]
      %v637 = vld [vmem:[%s575 + $0x68] sm:$0x1]
      %v638 = vld [vmem:[%s575 + $0x70] sm:$0xff]
      %v639 = vld [vmem:[%s575 + $0x78] sm:$0x1]
      %v640 = vld [vmem:[%s585] sm:$0xff]
      %v641 = vld [vmem:[%s585 + $0x8] sm:$0xff]
      %v642 = vld [vmem:[%s585 + $0x10] sm:$0xff]
      %v643 = vld [vmem:[%s585 + $0x18] sm:$0xff]
      %v644 = vld [vmem:[%s585 + $0x20] sm:$0xff]
      %v645 = vld [vmem:[%s585 + $0x28] sm:$0xff]
      %v646 = vld [vmem:[%s585 + $0x30] sm:$0xff]
      %v647 = vld [vmem:[%s585 + $0x38] sm:$0xff]
      %v648 = vld [vmem:[%s6] sm:$0xff]
      %v649 = vld [vmem:[%s6 + $0x8] sm:$0xf]
      %v650 = vld [vmem:[%s6 + $0x10] sm:$0xff]
      %v651 = vld [vmem:[%s6 + $0x18] sm:$0xf]
      %v652 = vld [vmem:[%s6 + $0x20] sm:$0xff]
      %v653 = vld [vmem:[%s6 + $0x28] sm:$0xf]
      %v654 = vld [vmem:[%s7] sm:$0x1]
      %663 = vrot.lane.b32.xlu0 %v624, 4
      %v664 = vpop.permute.xlu0 %663
      %665 = vrot.lane.b32.xlu0 %v626, 4
      %v666 = vpop.permute.xlu0 %665
      %667 = vrot.lane.b32.xlu0 %v628, 4
      %v668 = vpop.permute.xlu0 %667
      %669 = vrot.lane.b32.xlu0 %v630, 4
      %v670 = vpop.permute.xlu0 %669
      %671 = vrot.lane.b32.xlu0 %v632, 4
      %v672 = vpop.permute.xlu0 %671
      %673 = vrot.lane.b32.xlu0 %v634, 4
      %v674 = vpop.permute.xlu0 %673
      %675 = vrot.lane.b32.xlu0 %v636, 4
      %v676 = vpop.permute.xlu0 %675
      %677 = vrot.lane.b32.xlu0 %v638, 4
      %v678 = vpop.permute.xlu0 %677
      %695 = vrot.lane.b32.xlu0 %v599, 8
      %v696 = vpop.permute.xlu0 %695
      %697 = vrot.lane.b32.xlu0 %v601, 8
      %v698 = vpop.permute.xlu0 %697
      %699 = vrot.lane.b32.xlu0 %v603, 8
      %v700 = vpop.permute.xlu0 %699
      %701 = vrot.lane.b32.xlu0 %v605, 8
      %v702 = vpop.permute.xlu0 %701
      %703 = vrot.lane.b32.xlu0 %v607, 8
      %v704 = vpop.permute.xlu0 %703
      %705 = vrot.lane.b32.xlu0 %v609, 8
      %v706 = vpop.permute.xlu0 %705
      %707 = vrot.lane.b32.xlu0 %v611, 8
      %v708 = vpop.permute.xlu0 %707
      %709 = vrot.lane.b32.xlu0 %v613, 8
      %v710 = vpop.permute.xlu0 %709
      %vm719 = vcmask 31744
      %v720 = vsel %vm719, %v597, %v664
      %v721 = vsel %vm719, %v599, %v666
      %v722 = vsel %vm719, %v601, %v668
      %v723 = vsel %vm719, %v603, %v670
      %v724 = vsel %vm719, %v605, %v672
      %v725 = vsel %vm719, %v607, %v674
      %v726 = vsel %vm719, %v609, %v676
      %v727 = vsel %vm719, %v611, %v678
      %vm728 = vcmask 64512
      %v729 = vsel %vm728, %v720, %v696
      %v730 = vsel %vm728, %v721, %v698
      %v731 = vsel %vm728, %v722, %v700
      %v732 = vsel %vm728, %v723, %v702
      %v733 = vsel %vm728, %v724, %v704
      %v734 = vsel %vm728, %v725, %v706
      %v735 = vsel %vm728, %v726, %v708
      %v736 = vsel %vm728, %v727, %v710
      %745 = vrot.lane.b32.xlu0 %v640, 4
      %v746 = vpop.permute.xlu0 %745
      %747 = vrot.lane.b32.xlu0 %v641, 4
      %v748 = vpop.permute.xlu0 %747
      %749 = vrot.lane.b32.xlu0 %v642, 4
      %v750 = vpop.permute.xlu0 %749
      %751 = vrot.lane.b32.xlu0 %v643, 4
      %v752 = vpop.permute.xlu0 %751
      %753 = vrot.lane.b32.xlu0 %v644, 4
      %v754 = vpop.permute.xlu0 %753
      %755 = vrot.lane.b32.xlu0 %v645, 4
      %v756 = vpop.permute.xlu0 %755
      %757 = vrot.lane.b32.xlu0 %v646, 4
      %v758 = vpop.permute.xlu0 %757
      %759 = vrot.lane.b32.xlu0 %v647, 4
      %v760 = vpop.permute.xlu0 %759
      %777 = vrot.lane.b32.xlu0 %v616, 8
      %v778 = vpop.permute.xlu0 %777
      %779 = vrot.lane.b32.xlu0 %v617, 8
      %v780 = vpop.permute.xlu0 %779
      %781 = vrot.lane.b32.xlu0 %v618, 8
      %v782 = vpop.permute.xlu0 %781
      %783 = vrot.lane.b32.xlu0 %v619, 8
      %v784 = vpop.permute.xlu0 %783
      %785 = vrot.lane.b32.xlu0 %v620, 8
      %v786 = vpop.permute.xlu0 %785
      %787 = vrot.lane.b32.xlu0 %v621, 8
      %v788 = vpop.permute.xlu0 %787
      %789 = vrot.lane.b32.xlu0 %v622, 8
      %v790 = vpop.permute.xlu0 %789
      %791 = vrot.lane.b32.xlu0 %v623, 8
      %v792 = vpop.permute.xlu0 %791
      %v801 = vsel %vm719, %v615, %v746
      %v802 = vsel %vm719, %v616, %v748
      %v803 = vsel %vm719, %v617, %v750
      %v804 = vsel %vm719, %v618, %v752
      %v805 = vsel %vm719, %v619, %v754
      %v806 = vsel %vm719, %v620, %v756
      %v807 = vsel %vm719, %v621, %v758
      %v808 = vsel %vm719, %v622, %v760
      %v809 = vsel %vm728, %v801, %v778
      %v810 = vsel %vm728, %v802, %v780
      %v811 = vsel %vm728, %v803, %v782
      %v812 = vsel %vm728, %v804, %v784
      %v813 = vsel %vm728, %v805, %v786
      %v814 = vsel %vm728, %v806, %v788
      %v815 = vsel %vm728, %v807, %v790
      %v816 = vsel %vm728, %v808, %v792
      %825 = vrot.lane.b32.xlu0 %v625, 4
      %v826 = vpop.permute.xlu0 %825
      %827 = vrot.lane.b32.xlu0 %v627, 4
      %v828 = vpop.permute.xlu0 %827
      %829 = vrot.lane.b32.xlu0 %v629, 4
      %v830 = vpop.permute.xlu0 %829
      %831 = vrot.lane.b32.xlu0 %v631, 4
      %v832 = vpop.permute.xlu0 %831
      %833 = vrot.lane.b32.xlu0 %v633, 4
      %v834 = vpop.permute.xlu0 %833
      %835 = vrot.lane.b32.xlu0 %v635, 4
      %v836 = vpop.permute.xlu0 %835
      %837 = vrot.lane.b32.xlu0 %v637, 4
      %v838 = vpop.permute.xlu0 %837
      %839 = vrot.lane.b32.xlu0 %v639, 4
      %v840 = vpop.permute.xlu0 %839
      %857 = vrot.lane.b32.xlu0 %v600, 8
      %v858 = vpop.permute.xlu0 %857
      %859 = vrot.lane.b32.xlu0 %v602, 8
      %v860 = vpop.permute.xlu0 %859
      %861 = vrot.lane.b32.xlu0 %v604, 8
      %v862 = vpop.permute.xlu0 %861
      %863 = vrot.lane.b32.xlu0 %v606, 8
      %v864 = vpop.permute.xlu0 %863
      %865 = vrot.lane.b32.xlu0 %v608, 8
      %v866 = vpop.permute.xlu0 %865
      %867 = vrot.lane.b32.xlu0 %v610, 8
      %v868 = vpop.permute.xlu0 %867
      %869 = vrot.lane.b32.xlu0 %v612, 8
      %v870 = vpop.permute.xlu0 %869
      %871 = vrot.lane.b32.xlu0 %v614, 8
      %v872 = vpop.permute.xlu0 %871
      %v881 = vsel %vm719, %v598, %v826
      %v882 = vsel %vm719, %v600, %v828
      %v883 = vsel %vm719, %v602, %v830
      %v884 = vsel %vm719, %v604, %v832
      %v885 = vsel %vm719, %v606, %v834
      %v886 = vsel %vm719, %v608, %v836
      %v887 = vsel %vm719, %v610, %v838
      %v888 = vsel %vm719, %v612, %v840
      %v889 = vsel %vm728, %v881, %v858
      %v890 = vsel %vm728, %v882, %v860
      %v891 = vsel %vm728, %v883, %v862
      %v892 = vsel %vm728, %v884, %v864
      %v893 = vsel %vm728, %v885, %v866
      %v894 = vsel %vm728, %v886, %v868
      %v895 = vsel %vm728, %v887, %v870
      %v896 = vsel %vm728, %v888, %v872
      %vm897 = vcmask 97280
      %v899 = vsel %vm897, %v809, 0
      %v902 = vsel %vm897, %v810, 0
      %v905 = vsel %vm897, %v811, 0
      %v908 = vsel %vm897, %v812, 0
      %v911 = vsel %vm897, %v813, 0
      %v914 = vsel %vm897, %v814, 0
      %v917 = vsel %vm897, %v815, 0
      %v920 = vsel %vm897, %v816, 0
      %vm922 = vcmask 1043456
      %v924 = vsel %vm922, %v651, 0
      %926 = vmatpush.msra.mxu0 0.0
      %927 = vmatpush.msra.mxu0 0.0
      %928 = vmatpush.msra.mxu0 0.0
      %929 = vmatpush.msra.mxu0 0.0
      %930 = vmatpush.msra.mxu0 0.0
      %931 = vmatpush.msra.mxu0 0.0
      %932 = vmatpush.msra.mxu0 0.0
      %933 = vmatpush.msra.mxu0 0.0
      %934 = vmatpush.msra.mxu0 0.0
      %935 = vmatpush.msra.mxu0 0.0
      %936 = vmatpush.msra.mxu0 0.0
      %937 = vmatpush.msra.mxu0 0.0
      %938 = vmatpush.msra.mxu0 0.0
      %939 = vmatpush.msra.mxu0 0.0
      %v940 = vand.u32 %v924, 4294901760
      %941 = vmatpush.msra.mxu0 %v940
      %v942 = vand.u32 %v650, 4294901760
      %943 = vmatpush.msra.mxu0 %v942
      %v944 = vand.u32 %v899, 4294901760
      %v945 = vsub.f32 %v899, %v944
      %v946 = vand.u32 %v945, 4294901760
      %v947 = vsub.f32 %v945, %v946
      %v948 = vand.u32 %v947, 4294901760
      %949 = vmatmul.f32.gmra.mxu0 %v948
      %v950 = vpop.f32.mrf.mxu0
      %v951 = vadd.f32 0.0, %v950
      %v952 = vand.u32 %v902, 4294901760
      %v953 = vsub.f32 %v902, %v952
      %v954 = vand.u32 %v953, 4294901760
      %v955 = vsub.f32 %v953, %v954
      %v956 = vand.u32 %v955, 4294901760
      %957 = vmatmul.f32.gmra.mxu0 %v956
      %v958 = vpop.f32.mrf.mxu0
      %v959 = vadd.f32 0.0, %v958
      %v960 = vand.u32 %v905, 4294901760
      %v961 = vsub.f32 %v905, %v960
      %v962 = vand.u32 %v961, 4294901760
      %v963 = vsub.f32 %v961, %v962
      %v964 = vand.u32 %v963, 4294901760
      %965 = vmatmul.f32.gmra.mxu0 %v964
      %v966 = vpop.f32.mrf.mxu0
      %v967 = vadd.f32 0.0, %v966
      %v968 = vand.u32 %v908, 4294901760
      %v969 = vsub.f32 %v908, %v968
      %v970 = vand.u32 %v969, 4294901760
      %v971 = vsub.f32 %v969, %v970
      %v972 = vand.u32 %v971, 4294901760
      %973 = vmatmul.f32.gmra.mxu0 %v972
      %v974 = vpop.f32.mrf.mxu0
      %v975 = vadd.f32 0.0, %v974
      %v976 = vand.u32 %v911, 4294901760
      %v977 = vsub.f32 %v911, %v976
      %v978 = vand.u32 %v977, 4294901760
      %v979 = vsub.f32 %v977, %v978
      %v980 = vand.u32 %v979, 4294901760
      %981 = vmatmul.f32.gmra.mxu0 %v980
      %v982 = vpop.f32.mrf.mxu0
      %v983 = vadd.f32 0.0, %v982
      %v984 = vand.u32 %v914, 4294901760
      %v985 = vsub.f32 %v914, %v984
      %v986 = vand.u32 %v985, 4294901760
      %v987 = vsub.f32 %v985, %v986
      %v988 = vand.u32 %v987, 4294901760
      %989 = vmatmul.f32.gmra.mxu0 %v988
      %v990 = vpop.f32.mrf.mxu0
      %v991 = vadd.f32 0.0, %v990
      %v992 = vand.u32 %v917, 4294901760
      %v993 = vsub.f32 %v917, %v992
      %v994 = vand.u32 %v993, 4294901760
      %v995 = vsub.f32 %v993, %v994
      %v996 = vand.u32 %v995, 4294901760
      %997 = vmatmul.f32.gmra.mxu0 %v996
      %v998 = vpop.f32.mrf.mxu0
      %v999 = vadd.f32 0.0, %v998
      %v1000 = vand.u32 %v920, 4294901760
      %v1001 = vsub.f32 %v920, %v1000
      %v1002 = vand.u32 %v1001, 4294901760
      %v1003 = vsub.f32 %v1001, %v1002
      %v1004 = vand.u32 %v1003, 4294901760
      %1005 = vmatmul.f32.gmra.mxu0 %v1004
      %v1006 = vpop.f32.mrf.mxu0
      %v1007 = vadd.f32 0.0, %v1006
      %1008 = vdwg.mxu0
      %1009 = vmatpush.msra.mxu0 0.0
      %1010 = vmatpush.msra.mxu0 0.0
      %1011 = vmatpush.msra.mxu0 0.0
      %1012 = vmatpush.msra.mxu0 0.0
      %1013 = vmatpush.msra.mxu0 0.0
      %1014 = vmatpush.msra.mxu0 0.0
      %1015 = vmatpush.msra.mxu0 0.0
      %1016 = vmatpush.msra.mxu0 0.0
      %1017 = vmatpush.msra.mxu0 0.0
      %1018 = vmatpush.msra.mxu0 0.0
      %1019 = vmatpush.msra.mxu0 0.0
      %1020 = vmatpush.msra.mxu0 0.0
      %1021 = vmatpush.msra.mxu0 0.0
      %1022 = vmatpush.msra.mxu0 0.0
      %v1023 = vand.u32 %v924, 4294901760
      %v1024 = vsub.f32 %v924, %v1023
      %v1025 = vand.u32 %v1024, 4294901760
      %v1026 = vsub.f32 %v1024, %v1025
      %v1027 = vand.u32 %v1026, 4294901760
      %1028 = vmatpush.msra.mxu0 %v1027
      %v1029 = vand.u32 %v650, 4294901760
      %v1030 = vsub.f32 %v650, %v1029
      %v1031 = vand.u32 %v1030, 4294901760
      %v1032 = vsub.f32 %v1030, %v1031
      %v1033 = vand.u32 %v1032, 4294901760
      %1034 = vmatpush.msra.mxu0 %v1033
      %v1035 = vand.u32 %v899, 4294901760
      %1036 = vmatmul.f32.gmra.mxu0 %v1035
      %v1037 = vpop.f32.mrf.mxu0
      %v1038 = vadd.f32 %v951, %v1037
      %v1039 = vand.u32 %v902, 4294901760
      %1040 = vmatmul.f32.gmra.mxu0 %v1039
      %v1041 = vpop.f32.mrf.mxu0
      %v1042 = vadd.f32 %v959, %v1041
      %v1043 = vand.u32 %v905, 4294901760
      %1044 = vmatmul.f32.gmra.mxu0 %v1043
      %v1045 = vpop.f32.mrf.mxu0
      %v1046 = vadd.f32 %v967, %v1045
      %v1047 = vand.u32 %v908, 4294901760
      %1048 = vmatmul.f32.gmra.mxu0 %v1047
      %v1049 = vpop.f32.mrf.mxu0
      %v1050 = vadd.f32 %v975, %v1049
      %v1051 = vand.u32 %v911, 4294901760
      %1052 = vmatmul.f32.gmra.mxu0 %v1051
      %v1053 = vpop.f32.mrf.mxu0
      %v1054 = vadd.f32 %v983, %v1053
      %v1055 = vand.u32 %v914, 4294901760
      %1056 = vmatmul.f32.gmra.mxu0 %v1055
      %v1057 = vpop.f32.mrf.mxu0
      %v1058 = vadd.f32 %v991, %v1057
      %v1059 = vand.u32 %v917, 4294901760
      %1060 = vmatmul.f32.gmra.mxu0 %v1059
      %v1061 = vpop.f32.mrf.mxu0
      %v1062 = vadd.f32 %v999, %v1061
      %v1063 = vand.u32 %v920, 4294901760
      %1064 = vmatmul.f32.gmra.mxu0 %v1063
      %v1065 = vpop.f32.mrf.mxu0
      %v1066 = vadd.f32 %v1007, %v1065
      %1067 = vdwg.mxu0
      %1068 = vmatpush.msra.mxu0 0.0
      %1069 = vmatpush.msra.mxu0 0.0
      %1070 = vmatpush.msra.mxu0 0.0
      %1071 = vmatpush.msra.mxu0 0.0
      %1072 = vmatpush.msra.mxu0 0.0
      %1073 = vmatpush.msra.mxu0 0.0
      %1074 = vmatpush.msra.mxu0 0.0
      %1075 = vmatpush.msra.mxu0 0.0
      %1076 = vmatpush.msra.mxu0 0.0
      %1077 = vmatpush.msra.mxu0 0.0
      %1078 = vmatpush.msra.mxu0 0.0
      %1079 = vmatpush.msra.mxu0 0.0
      %1080 = vmatpush.msra.mxu0 0.0
      %1081 = vmatpush.msra.mxu0 0.0
      %v1082 = vand.u32 %v924, 4294901760
      %v1083 = vsub.f32 %v924, %v1082
      %1084 = vmatpush.msra.mxu0 %v1083
      %v1085 = vand.u32 %v650, 4294901760
      %v1086 = vsub.f32 %v650, %v1085
      %1087 = vmatpush.msra.mxu0 %v1086
      %v1088 = vand.u32 %v899, 4294901760
      %v1089 = vsub.f32 %v899, %v1088
      %1090 = vmatmul.f32.gmra.mxu0 %v1089
      %v1091 = vpop.f32.mrf.mxu0
      %v1092 = vadd.f32 %v1038, %v1091
      %v1093 = vand.u32 %v902, 4294901760
      %v1094 = vsub.f32 %v902, %v1093
      %1095 = vmatmul.f32.gmra.mxu0 %v1094
      %v1096 = vpop.f32.mrf.mxu0
      %v1097 = vadd.f32 %v1042, %v1096
      %v1098 = vand.u32 %v905, 4294901760
      %v1099 = vsub.f32 %v905, %v1098
      %1100 = vmatmul.f32.gmra.mxu0 %v1099
      %v1101 = vpop.f32.mrf.mxu0
      %v1102 = vadd.f32 %v1046, %v1101
      %v1103 = vand.u32 %v908, 4294901760
      %v1104 = vsub.f32 %v908, %v1103
      %1105 = vmatmul.f32.gmra.mxu0 %v1104
      %v1106 = vpop.f32.mrf.mxu0
      %v1107 = vadd.f32 %v1050, %v1106
      %v1108 = vand.u32 %v911, 4294901760
      %v1109 = vsub.f32 %v911, %v1108
      %1110 = vmatmul.f32.gmra.mxu0 %v1109
      %v1111 = vpop.f32.mrf.mxu0
      %v1112 = vadd.f32 %v1054, %v1111
      %v1113 = vand.u32 %v914, 4294901760
      %v1114 = vsub.f32 %v914, %v1113
      %1115 = vmatmul.f32.gmra.mxu0 %v1114
      %v1116 = vpop.f32.mrf.mxu0
      %v1117 = vadd.f32 %v1058, %v1116
      %v1118 = vand.u32 %v917, 4294901760
      %v1119 = vsub.f32 %v917, %v1118
      %1120 = vmatmul.f32.gmra.mxu0 %v1119
      %v1121 = vpop.f32.mrf.mxu0
      %v1122 = vadd.f32 %v1062, %v1121
      %v1123 = vand.u32 %v920, 4294901760
      %v1124 = vsub.f32 %v920, %v1123
      %1125 = vmatmul.f32.gmra.mxu0 %v1124
      %v1126 = vpop.f32.mrf.mxu0
      %v1127 = vadd.f32 %v1066, %v1126
      %1128 = vdwg.mxu0
      %1129 = vmatpush.msra.mxu0 0.0
      %1130 = vmatpush.msra.mxu0 0.0
      %1131 = vmatpush.msra.mxu0 0.0
      %1132 = vmatpush.msra.mxu0 0.0
      %1133 = vmatpush.msra.mxu0 0.0
      %1134 = vmatpush.msra.mxu0 0.0
      %1135 = vmatpush.msra.mxu0 0.0
      %1136 = vmatpush.msra.mxu0 0.0
      %1137 = vmatpush.msra.mxu0 0.0
      %1138 = vmatpush.msra.mxu0 0.0
      %1139 = vmatpush.msra.mxu0 0.0
      %1140 = vmatpush.msra.mxu0 0.0
      %1141 = vmatpush.msra.mxu0 0.0
      %1142 = vmatpush.msra.mxu0 0.0
      %v1143 = vand.u32 %v924, 4294901760
      %1144 = vmatpush.msra.mxu0 %v1143
      %v1145 = vand.u32 %v650, 4294901760
      %1146 = vmatpush.msra.mxu0 %v1145
      %v1147 = vand.u32 %v899, 4294901760
      %v1148 = vsub.f32 %v899, %v1147
      %v1149 = vand.u32 %v1148, 4294901760
      %1150 = vmatmul.f32.gmra.mxu0 %v1149
      %v1151 = vpop.f32.mrf.mxu0
      %v1152 = vadd.f32 %v1092, %v1151
      %v1153 = vand.u32 %v902, 4294901760
      %v1154 = vsub.f32 %v902, %v1153
      %v1155 = vand.u32 %v1154, 4294901760
      %1156 = vmatmul.f32.gmra.mxu0 %v1155
      %v1157 = vpop.f32.mrf.mxu0
      %v1158 = vadd.f32 %v1097, %v1157
      %v1159 = vand.u32 %v905, 4294901760
      %v1160 = vsub.f32 %v905, %v1159
      %v1161 = vand.u32 %v1160, 4294901760
      %1162 = vmatmul.f32.gmra.mxu0 %v1161
      %v1163 = vpop.f32.mrf.mxu0
      %v1164 = vadd.f32 %v1102, %v1163
      %v1165 = vand.u32 %v908, 4294901760
      %v1166 = vsub.f32 %v908, %v1165
      %v1167 = vand.u32 %v1166, 4294901760
      %1168 = vmatmul.f32.gmra.mxu0 %v1167
      %v1169 = vpop.f32.mrf.mxu0
      %v1170 = vadd.f32 %v1107, %v1169
      %v1171 = vand.u32 %v911, 4294901760
      %v1172 = vsub.f32 %v911, %v1171
      %v1173 = vand.u32 %v1172, 4294901760
      %1174 = vmatmul.f32.gmra.mxu0 %v1173
      %v1175 = vpop.f32.mrf.mxu0
      %v1176 = vadd.f32 %v1112, %v1175
      %v1177 = vand.u32 %v914, 4294901760
      %v1178 = vsub.f32 %v914, %v1177
      %v1179 = vand.u32 %v1178, 4294901760
      %1180 = vmatmul.f32.gmra.mxu0 %v1179
      %v1181 = vpop.f32.mrf.mxu0
      %v1182 = vadd.f32 %v1117, %v1181
      %v1183 = vand.u32 %v917, 4294901760
      %v1184 = vsub.f32 %v917, %v1183
      %v1185 = vand.u32 %v1184, 4294901760
      %1186 = vmatmul.f32.gmra.mxu0 %v1185
      %v1187 = vpop.f32.mrf.mxu0
      %v1188 = vadd.f32 %v1122, %v1187
      %v1189 = vand.u32 %v920, 4294901760
      %v1190 = vsub.f32 %v920, %v1189
      %v1191 = vand.u32 %v1190, 4294901760
      %1192 = vmatmul.f32.gmra.mxu0 %v1191
      %v1193 = vpop.f32.mrf.mxu0
      %v1194 = vadd.f32 %v1127, %v1193
      %1195 = vdwg.mxu0
      %1196 = vmatpush.msra.mxu0 0.0
      %1197 = vmatpush.msra.mxu0 0.0
      %1198 = vmatpush.msra.mxu0 0.0
      %1199 = vmatpush.msra.mxu0 0.0
      %1200 = vmatpush.msra.mxu0 0.0
      %1201 = vmatpush.msra.mxu0 0.0
      %1202 = vmatpush.msra.mxu0 0.0
      %1203 = vmatpush.msra.mxu0 0.0
      %1204 = vmatpush.msra.mxu0 0.0
      %1205 = vmatpush.msra.mxu0 0.0
      %1206 = vmatpush.msra.mxu0 0.0
      %1207 = vmatpush.msra.mxu0 0.0
      %1208 = vmatpush.msra.mxu0 0.0
      %1209 = vmatpush.msra.mxu0 0.0
      %v1210 = vand.u32 %v924, 4294901760
      %v1211 = vsub.f32 %v924, %v1210
      %v1212 = vand.u32 %v1211, 4294901760
      %1213 = vmatpush.msra.mxu0 %v1212
      %v1214 = vand.u32 %v650, 4294901760
      %v1215 = vsub.f32 %v650, %v1214
      %v1216 = vand.u32 %v1215, 4294901760
      %1217 = vmatpush.msra.mxu0 %v1216
      %v1218 = vand.u32 %v899, 4294901760
      %1219 = vmatmul.f32.gmra.mxu0 %v1218
      %v1220 = vpop.f32.mrf.mxu0
      %v1221 = vadd.f32 %v1152, %v1220
      %v1222 = vand.u32 %v902, 4294901760
      %1223 = vmatmul.f32.gmra.mxu0 %v1222
      %v1224 = vpop.f32.mrf.mxu0
      %v1225 = vadd.f32 %v1158, %v1224
      %v1226 = vand.u32 %v905, 4294901760
      %1227 = vmatmul.f32.gmra.mxu0 %v1226
      %v1228 = vpop.f32.mrf.mxu0
      %v1229 = vadd.f32 %v1164, %v1228
      %v1230 = vand.u32 %v908, 4294901760
      %1231 = vmatmul.f32.gmra.mxu0 %v1230
      %v1232 = vpop.f32.mrf.mxu0
      %v1233 = vadd.f32 %v1170, %v1232
      %v1234 = vand.u32 %v911, 4294901760
      %1235 = vmatmul.f32.gmra.mxu0 %v1234
      %v1236 = vpop.f32.mrf.mxu0
      %v1237 = vadd.f32 %v1176, %v1236
      %v1238 = vand.u32 %v914, 4294901760
      %1239 = vmatmul.f32.gmra.mxu0 %v1238
      %v1240 = vpop.f32.mrf.mxu0
      %v1241 = vadd.f32 %v1182, %v1240
      %v1242 = vand.u32 %v917, 4294901760
      %1243 = vmatmul.f32.gmra.mxu0 %v1242
      %v1244 = vpop.f32.mrf.mxu0
      %v1245 = vadd.f32 %v1188, %v1244
      %v1246 = vand.u32 %v920, 4294901760
      %1247 = vmatmul.f32.gmra.mxu0 %v1246
      %v1248 = vpop.f32.mrf.mxu0
      %v1249 = vadd.f32 %v1194, %v1248
      %1250 = vdwg.mxu0
      %1251 = vmatpush.msra.mxu0 0.0
      %1252 = vmatpush.msra.mxu0 0.0
      %1253 = vmatpush.msra.mxu0 0.0
      %1254 = vmatpush.msra.mxu0 0.0
      %1255 = vmatpush.msra.mxu0 0.0
      %1256 = vmatpush.msra.mxu0 0.0
      %1257 = vmatpush.msra.mxu0 0.0
      %1258 = vmatpush.msra.mxu0 0.0
      %1259 = vmatpush.msra.mxu0 0.0
      %1260 = vmatpush.msra.mxu0 0.0
      %1261 = vmatpush.msra.mxu0 0.0
      %1262 = vmatpush.msra.mxu0 0.0
      %1263 = vmatpush.msra.mxu0 0.0
      %1264 = vmatpush.msra.mxu0 0.0
      %v1265 = vand.u32 %v924, 4294901760
      %1266 = vmatpush.msra.mxu0 %v1265
      %v1267 = vand.u32 %v650, 4294901760
      %1268 = vmatpush.msra.mxu0 %v1267
      %v1269 = vand.u32 %v899, 4294901760
      %1270 = vmatmul.f32.gmra.mxu0 %v1269
      %v1271 = vpop.f32.mrf.mxu0
      %v1272 = vadd.f32 %v1221, %v1271
      %v1273 = vand.u32 %v902, 4294901760
      %1274 = vmatmul.f32.gmra.mxu0 %v1273
      %v1275 = vpop.f32.mrf.mxu0
      %v1276 = vadd.f32 %v1225, %v1275
      %v1277 = vand.u32 %v905, 4294901760
      %1278 = vmatmul.f32.gmra.mxu0 %v1277
      %v1279 = vpop.f32.mrf.mxu0
      %v1280 = vadd.f32 %v1229, %v1279
      %v1281 = vand.u32 %v908, 4294901760
      %1282 = vmatmul.f32.gmra.mxu0 %v1281
      %v1283 = vpop.f32.mrf.mxu0
      %v1284 = vadd.f32 %v1233, %v1283
      %v1285 = vand.u32 %v911, 4294901760
      %1286 = vmatmul.f32.gmra.mxu0 %v1285
      %v1287 = vpop.f32.mrf.mxu0
      %v1288 = vadd.f32 %v1237, %v1287
      %v1289 = vand.u32 %v914, 4294901760
      %1290 = vmatmul.f32.gmra.mxu0 %v1289
      %v1291 = vpop.f32.mrf.mxu0
      %v1292 = vadd.f32 %v1241, %v1291
      %v1293 = vand.u32 %v917, 4294901760
      %1294 = vmatmul.f32.gmra.mxu0 %v1293
      %v1295 = vpop.f32.mrf.mxu0
      %v1296 = vadd.f32 %v1245, %v1295
      %v1297 = vand.u32 %v920, 4294901760
      %1298 = vmatmul.f32.gmra.mxu0 %v1297
      %v1299 = vpop.f32.mrf.mxu0
      %v1300 = vadd.f32 %v1249, %v1299
      %1301 = vdwg.mxu0
      %v1303 = vsel %vm897, %v729, 0
      %v1306 = vsel %vm897, %v730, 0
      %v1309 = vsel %vm897, %v731, 0
      %v1312 = vsel %vm897, %v732, 0
      %v1315 = vsel %vm897, %v733, 0
      %v1318 = vsel %vm897, %v734, 0
      %v1321 = vsel %vm897, %v735, 0
      %v1324 = vsel %vm897, %v736, 0
      %v1327 = vsel %vm922, %v649, 0
      %1329 = vmatpush.msra.mxu0 0.0
      %1330 = vmatpush.msra.mxu0 0.0
      %1331 = vmatpush.msra.mxu0 0.0
      %1332 = vmatpush.msra.mxu0 0.0
      %1333 = vmatpush.msra.mxu0 0.0
      %1334 = vmatpush.msra.mxu0 0.0
      %1335 = vmatpush.msra.mxu0 0.0
      %1336 = vmatpush.msra.mxu0 0.0
      %1337 = vmatpush.msra.mxu0 0.0
      %1338 = vmatpush.msra.mxu0 0.0
      %1339 = vmatpush.msra.mxu0 0.0
      %1340 = vmatpush.msra.mxu0 0.0
      %1341 = vmatpush.msra.mxu0 0.0
      %1342 = vmatpush.msra.mxu0 0.0
      %v1343 = vand.u32 %v1327, 4294901760
      %1344 = vmatpush.msra.mxu0 %v1343
      %v1345 = vand.u32 %v648, 4294901760
      %1346 = vmatpush.msra.mxu0 %v1345
      %v1347 = vand.u32 %v1303, 4294901760
      %v1348 = vsub.f32 %v1303, %v1347
      %v1349 = vand.u32 %v1348, 4294901760
      %v1350 = vsub.f32 %v1348, %v1349
      %v1351 = vand.u32 %v1350, 4294901760
      %1352 = vmatmul.f32.gmra.mxu0 %v1351
      %v1353 = vpop.f32.mrf.mxu0
      %v1354 = vadd.f32 %v1272, %v1353
      %v1355 = vand.u32 %v1306, 4294901760
      %v1356 = vsub.f32 %v1306, %v1355
      %v1357 = vand.u32 %v1356, 4294901760
      %v1358 = vsub.f32 %v1356, %v1357
      %v1359 = vand.u32 %v1358, 4294901760
      %1360 = vmatmul.f32.gmra.mxu0 %v1359
      %v1361 = vpop.f32.mrf.mxu0
      %v1362 = vadd.f32 %v1276, %v1361
      %v1363 = vand.u32 %v1309, 4294901760
      %v1364 = vsub.f32 %v1309, %v1363
      %v1365 = vand.u32 %v1364, 4294901760
      %v1366 = vsub.f32 %v1364, %v1365
      %v1367 = vand.u32 %v1366, 4294901760
      %1368 = vmatmul.f32.gmra.mxu0 %v1367
      %v1369 = vpop.f32.mrf.mxu0
      %v1370 = vadd.f32 %v1280, %v1369
      %v1371 = vand.u32 %v1312, 4294901760
      %v1372 = vsub.f32 %v1312, %v1371
      %v1373 = vand.u32 %v1372, 4294901760
      %v1374 = vsub.f32 %v1372, %v1373
      %v1375 = vand.u32 %v1374, 4294901760
      %1376 = vmatmul.f32.gmra.mxu0 %v1375
      %v1377 = vpop.f32.mrf.mxu0
      %v1378 = vadd.f32 %v1284, %v1377
      %v1379 = vand.u32 %v1315, 4294901760
      %v1380 = vsub.f32 %v1315, %v1379
      %v1381 = vand.u32 %v1380, 4294901760
      %v1382 = vsub.f32 %v1380, %v1381
      %v1383 = vand.u32 %v1382, 4294901760
      %1384 = vmatmul.f32.gmra.mxu0 %v1383
      %v1385 = vpop.f32.mrf.mxu0
      %v1386 = vadd.f32 %v1288, %v1385
      %v1387 = vand.u32 %v1318, 4294901760
      %v1388 = vsub.f32 %v1318, %v1387
      %v1389 = vand.u32 %v1388, 4294901760
      %v1390 = vsub.f32 %v1388, %v1389
      %v1391 = vand.u32 %v1390, 4294901760
      %1392 = vmatmul.f32.gmra.mxu0 %v1391
      %v1393 = vpop.f32.mrf.mxu0
      %v1394 = vadd.f32 %v1292, %v1393
      %v1395 = vand.u32 %v1321, 4294901760
      %v1396 = vsub.f32 %v1321, %v1395
      %v1397 = vand.u32 %v1396, 4294901760
      %v1398 = vsub.f32 %v1396, %v1397
      %v1399 = vand.u32 %v1398, 4294901760
      %1400 = vmatmul.f32.gmra.mxu0 %v1399
      %v1401 = vpop.f32.mrf.mxu0
      %v1402 = vadd.f32 %v1296, %v1401
      %v1403 = vand.u32 %v1324, 4294901760
      %v1404 = vsub.f32 %v1324, %v1403
      %v1405 = vand.u32 %v1404, 4294901760
      %v1406 = vsub.f32 %v1404, %v1405
      %v1407 = vand.u32 %v1406, 4294901760
      %1408 = vmatmul.f32.gmra.mxu0 %v1407
      %v1409 = vpop.f32.mrf.mxu0
      %v1410 = vadd.f32 %v1300, %v1409
      %1411 = vdwg.mxu0
      %1412 = vmatpush.msra.mxu0 0.0
      %1413 = vmatpush.msra.mxu0 0.0
      %1414 = vmatpush.msra.mxu0 0.0
      %1415 = vmatpush.msra.mxu0 0.0
      %1416 = vmatpush.msra.mxu0 0.0
      %1417 = vmatpush.msra.mxu0 0.0
      %1418 = vmatpush.msra.mxu0 0.0
      %1419 = vmatpush.msra.mxu0 0.0
      %1420 = vmatpush.msra.mxu0 0.0
      %1421 = vmatpush.msra.mxu0 0.0
      %1422 = vmatpush.msra.mxu0 0.0
      %1423 = vmatpush.msra.mxu0 0.0
      %1424 = vmatpush.msra.mxu0 0.0
      %1425 = vmatpush.msra.mxu0 0.0
      %v1426 = vand.u32 %v1327, 4294901760
      %v1427 = vsub.f32 %v1327, %v1426
      %v1428 = vand.u32 %v1427, 4294901760
      %v1429 = vsub.f32 %v1427, %v1428
      %v1430 = vand.u32 %v1429, 4294901760
      %1431 = vmatpush.msra.mxu0 %v1430
      %v1432 = vand.u32 %v648, 4294901760
      %v1433 = vsub.f32 %v648, %v1432
      %v1434 = vand.u32 %v1433, 4294901760
      %v1435 = vsub.f32 %v1433, %v1434
      %v1436 = vand.u32 %v1435, 4294901760
      %1437 = vmatpush.msra.mxu0 %v1436
      %v1438 = vand.u32 %v1303, 4294901760
      %1439 = vmatmul.f32.gmra.mxu0 %v1438
      %v1440 = vpop.f32.mrf.mxu0
      %v1441 = vadd.f32 %v1354, %v1440
      %v1442 = vand.u32 %v1306, 4294901760
      %1443 = vmatmul.f32.gmra.mxu0 %v1442
      %v1444 = vpop.f32.mrf.mxu0
      %v1445 = vadd.f32 %v1362, %v1444
      %v1446 = vand.u32 %v1309, 4294901760
      %1447 = vmatmul.f32.gmra.mxu0 %v1446
      %v1448 = vpop.f32.mrf.mxu0
      %v1449 = vadd.f32 %v1370, %v1448
      %v1450 = vand.u32 %v1312, 4294901760
      %1451 = vmatmul.f32.gmra.mxu0 %v1450
      %v1452 = vpop.f32.mrf.mxu0
      %v1453 = vadd.f32 %v1378, %v1452
      %v1454 = vand.u32 %v1315, 4294901760
      %1455 = vmatmul.f32.gmra.mxu0 %v1454
      %v1456 = vpop.f32.mrf.mxu0
      %v1457 = vadd.f32 %v1386, %v1456
      %v1458 = vand.u32 %v1318, 4294901760
      %1459 = vmatmul.f32.gmra.mxu0 %v1458
      %v1460 = vpop.f32.mrf.mxu0
      %v1461 = vadd.f32 %v1394, %v1460
      %v1462 = vand.u32 %v1321, 4294901760
      %1463 = vmatmul.f32.gmra.mxu0 %v1462
      %v1464 = vpop.f32.mrf.mxu0
      %v1465 = vadd.f32 %v1402, %v1464
      %v1466 = vand.u32 %v1324, 4294901760
      %1467 = vmatmul.f32.gmra.mxu0 %v1466
      %v1468 = vpop.f32.mrf.mxu0
      %v1469 = vadd.f32 %v1410, %v1468
      %1470 = vdwg.mxu0
      %1471 = vmatpush.msra.mxu0 0.0
      %1472 = vmatpush.msra.mxu0 0.0
      %1473 = vmatpush.msra.mxu0 0.0
      %1474 = vmatpush.msra.mxu0 0.0
      %1475 = vmatpush.msra.mxu0 0.0
      %1476 = vmatpush.msra.mxu0 0.0
      %1477 = vmatpush.msra.mxu0 0.0
      %1478 = vmatpush.msra.mxu0 0.0
      %1479 = vmatpush.msra.mxu0 0.0
      %1480 = vmatpush.msra.mxu0 0.0
      %1481 = vmatpush.msra.mxu0 0.0
      %1482 = vmatpush.msra.mxu0 0.0
      %1483 = vmatpush.msra.mxu0 0.0
      %1484 = vmatpush.msra.mxu0 0.0
      %v1485 = vand.u32 %v1327, 4294901760
      %v1486 = vsub.f32 %v1327, %v1485
      %1487 = vmatpush.msra.mxu0 %v1486
      %v1488 = vand.u32 %v648, 4294901760
      %v1489 = vsub.f32 %v648, %v1488
      %1490 = vmatpush.msra.mxu0 %v1489
      %v1491 = vand.u32 %v1303, 4294901760
      %v1492 = vsub.f32 %v1303, %v1491
      %1493 = vmatmul.f32.gmra.mxu0 %v1492
      %v1494 = vpop.f32.mrf.mxu0
      %v1495 = vadd.f32 %v1441, %v1494
      %v1496 = vand.u32 %v1306, 4294901760
      %v1497 = vsub.f32 %v1306, %v1496
      %1498 = vmatmul.f32.gmra.mxu0 %v1497
      %v1499 = vpop.f32.mrf.mxu0
      %v1500 = vadd.f32 %v1445, %v1499
      %v1501 = vand.u32 %v1309, 4294901760
      %v1502 = vsub.f32 %v1309, %v1501
      %1503 = vmatmul.f32.gmra.mxu0 %v1502
      %v1504 = vpop.f32.mrf.mxu0
      %v1505 = vadd.f32 %v1449, %v1504
      %v1506 = vand.u32 %v1312, 4294901760
      %v1507 = vsub.f32 %v1312, %v1506
      %1508 = vmatmul.f32.gmra.mxu0 %v1507
      %v1509 = vpop.f32.mrf.mxu0
      %v1510 = vadd.f32 %v1453, %v1509
      %v1511 = vand.u32 %v1315, 4294901760
      %v1512 = vsub.f32 %v1315, %v1511
      %1513 = vmatmul.f32.gmra.mxu0 %v1512
      %v1514 = vpop.f32.mrf.mxu0
      %v1515 = vadd.f32 %v1457, %v1514
      %v1516 = vand.u32 %v1318, 4294901760
      %v1517 = vsub.f32 %v1318, %v1516
      %1518 = vmatmul.f32.gmra.mxu0 %v1517
      %v1519 = vpop.f32.mrf.mxu0
      %v1520 = vadd.f32 %v1461, %v1519
      %v1521 = vand.u32 %v1321, 4294901760
      %v1522 = vsub.f32 %v1321, %v1521
      %1523 = vmatmul.f32.gmra.mxu0 %v1522
      %v1524 = vpop.f32.mrf.mxu0
      %v1525 = vadd.f32 %v1465, %v1524
      %v1526 = vand.u32 %v1324, 4294901760
      %v1527 = vsub.f32 %v1324, %v1526
      %1528 = vmatmul.f32.gmra.mxu0 %v1527
      %v1529 = vpop.f32.mrf.mxu0
      %v1530 = vadd.f32 %v1469, %v1529
      %1531 = vdwg.mxu0
      %1532 = vmatpush.msra.mxu0 0.0
      %1533 = vmatpush.msra.mxu0 0.0
      %1534 = vmatpush.msra.mxu0 0.0
      %1535 = vmatpush.msra.mxu0 0.0
      %1536 = vmatpush.msra.mxu0 0.0
      %1537 = vmatpush.msra.mxu0 0.0
      %1538 = vmatpush.msra.mxu0 0.0
      %1539 = vmatpush.msra.mxu0 0.0
      %1540 = vmatpush.msra.mxu0 0.0
      %1541 = vmatpush.msra.mxu0 0.0
      %1542 = vmatpush.msra.mxu0 0.0
      %1543 = vmatpush.msra.mxu0 0.0
      %1544 = vmatpush.msra.mxu0 0.0
      %1545 = vmatpush.msra.mxu0 0.0
      %v1546 = vand.u32 %v1327, 4294901760
      %1547 = vmatpush.msra.mxu0 %v1546
      %v1548 = vand.u32 %v648, 4294901760
      %1549 = vmatpush.msra.mxu0 %v1548
      %v1550 = vand.u32 %v1303, 4294901760
      %v1551 = vsub.f32 %v1303, %v1550
      %v1552 = vand.u32 %v1551, 4294901760
      %1553 = vmatmul.f32.gmra.mxu0 %v1552
      %v1554 = vpop.f32.mrf.mxu0
      %v1555 = vadd.f32 %v1495, %v1554
      %v1556 = vand.u32 %v1306, 4294901760
      %v1557 = vsub.f32 %v1306, %v1556
      %v1558 = vand.u32 %v1557, 4294901760
      %1559 = vmatmul.f32.gmra.mxu0 %v1558
      %v1560 = vpop.f32.mrf.mxu0
      %v1561 = vadd.f32 %v1500, %v1560
      %v1562 = vand.u32 %v1309, 4294901760
      %v1563 = vsub.f32 %v1309, %v1562
      %v1564 = vand.u32 %v1563, 4294901760
      %1565 = vmatmul.f32.gmra.mxu0 %v1564
      %v1566 = vpop.f32.mrf.mxu0
      %v1567 = vadd.f32 %v1505, %v1566
      %v1568 = vand.u32 %v1312, 4294901760
      %v1569 = vsub.f32 %v1312, %v1568
      %v1570 = vand.u32 %v1569, 4294901760
      %1571 = vmatmul.f32.gmra.mxu0 %v1570
      %v1572 = vpop.f32.mrf.mxu0
      %v1573 = vadd.f32 %v1510, %v1572
      %v1574 = vand.u32 %v1315, 4294901760
      %v1575 = vsub.f32 %v1315, %v1574
      %v1576 = vand.u32 %v1575, 4294901760
      %1577 = vmatmul.f32.gmra.mxu0 %v1576
      %v1578 = vpop.f32.mrf.mxu0
      %v1579 = vadd.f32 %v1515, %v1578
      %v1580 = vand.u32 %v1318, 4294901760
      %v1581 = vsub.f32 %v1318, %v1580
      %v1582 = vand.u32 %v1581, 4294901760
      %1583 = vmatmul.f32.gmra.mxu0 %v1582
      %v1584 = vpop.f32.mrf.mxu0
      %v1585 = vadd.f32 %v1520, %v1584
      %v1586 = vand.u32 %v1321, 4294901760
      %v1587 = vsub.f32 %v1321, %v1586
      %v1588 = vand.u32 %v1587, 4294901760
      %1589 = vmatmul.f32.gmra.mxu0 %v1588
      %v1590 = vpop.f32.mrf.mxu0
      %v1591 = vadd.f32 %v1525, %v1590
      %v1592 = vand.u32 %v1324, 4294901760
      %v1593 = vsub.f32 %v1324, %v1592
      %v1594 = vand.u32 %v1593, 4294901760
      %1595 = vmatmul.f32.gmra.mxu0 %v1594
      %v1596 = vpop.f32.mrf.mxu0
      %v1597 = vadd.f32 %v1530, %v1596
      %1598 = vdwg.mxu0
      %1599 = vmatpush.msra.mxu0 0.0
      %1600 = vmatpush.msra.mxu0 0.0
      %1601 = vmatpush.msra.mxu0 0.0
      %1602 = vmatpush.msra.mxu0 0.0
      %1603 = vmatpush.msra.mxu0 0.0
      %1604 = vmatpush.msra.mxu0 0.0
      %1605 = vmatpush.msra.mxu0 0.0
      %1606 = vmatpush.msra.mxu0 0.0
      %1607 = vmatpush.msra.mxu0 0.0
      %1608 = vmatpush.msra.mxu0 0.0
      %1609 = vmatpush.msra.mxu0 0.0
      %1610 = vmatpush.msra.mxu0 0.0
      %1611 = vmatpush.msra.mxu0 0.0
      %1612 = vmatpush.msra.mxu0 0.0
      %v1613 = vand.u32 %v1327, 4294901760
      %v1614 = vsub.f32 %v1327, %v1613
      %v1615 = vand.u32 %v1614, 4294901760
      %1616 = vmatpush.msra.mxu0 %v1615
      %v1617 = vand.u32 %v648, 4294901760
      %v1618 = vsub.f32 %v648, %v1617
      %v1619 = vand.u32 %v1618, 4294901760
      %1620 = vmatpush.msra.mxu0 %v1619
      %v1621 = vand.u32 %v1303, 4294901760
      %1622 = vmatmul.f32.gmra.mxu0 %v1621
      %v1623 = vpop.f32.mrf.mxu0
      %v1624 = vadd.f32 %v1555, %v1623
      %v1625 = vand.u32 %v1306, 4294901760
      %1626 = vmatmul.f32.gmra.mxu0 %v1625
      %v1627 = vpop.f32.mrf.mxu0
      %v1628 = vadd.f32 %v1561, %v1627
      %v1629 = vand.u32 %v1309, 4294901760
      %1630 = vmatmul.f32.gmra.mxu0 %v1629
      %v1631 = vpop.f32.mrf.mxu0
      %v1632 = vadd.f32 %v1567, %v1631
      %v1633 = vand.u32 %v1312, 4294901760
      %1634 = vmatmul.f32.gmra.mxu0 %v1633
      %v1635 = vpop.f32.mrf.mxu0
      %v1636 = vadd.f32 %v1573, %v1635
      %v1637 = vand.u32 %v1315, 4294901760
      %1638 = vmatmul.f32.gmra.mxu0 %v1637
      %v1639 = vpop.f32.mrf.mxu0
      %v1640 = vadd.f32 %v1579, %v1639
      %v1641 = vand.u32 %v1318, 4294901760
      %1642 = vmatmul.f32.gmra.mxu0 %v1641
      %v1643 = vpop.f32.mrf.mxu0
      %v1644 = vadd.f32 %v1585, %v1643
      %v1645 = vand.u32 %v1321, 4294901760
      %1646 = vmatmul.f32.gmra.mxu0 %v1645
      %v1647 = vpop.f32.mrf.mxu0
      %v1648 = vadd.f32 %v1591, %v1647
      %v1649 = vand.u32 %v1324, 4294901760
      %1650 = vmatmul.f32.gmra.mxu0 %v1649
      %v1651 = vpop.f32.mrf.mxu0
      %v1652 = vadd.f32 %v1597, %v1651
      %1653 = vdwg.mxu0
      %1654 = vmatpush.msra.mxu0 0.0
      %1655 = vmatpush.msra.mxu0 0.0
      %1656 = vmatpush.msra.mxu0 0.0
      %1657 = vmatpush.msra.mxu0 0.0
      %1658 = vmatpush.msra.mxu0 0.0
      %1659 = vmatpush.msra.mxu0 0.0
      %1660 = vmatpush.msra.mxu0 0.0
      %1661 = vmatpush.msra.mxu0 0.0
      %1662 = vmatpush.msra.mxu0 0.0
      %1663 = vmatpush.msra.mxu0 0.0
      %1664 = vmatpush.msra.mxu0 0.0
      %1665 = vmatpush.msra.mxu0 0.0
      %1666 = vmatpush.msra.mxu0 0.0
      %1667 = vmatpush.msra.mxu0 0.0
      %v1668 = vand.u32 %v1327, 4294901760
      %1669 = vmatpush.msra.mxu0 %v1668
      %v1670 = vand.u32 %v648, 4294901760
      %1671 = vmatpush.msra.mxu0 %v1670
      %v1672 = vand.u32 %v1303, 4294901760
      %1673 = vmatmul.f32.gmra.mxu0 %v1672
      %v1674 = vpop.f32.mrf.mxu0
      %v1675 = vadd.f32 %v1624, %v1674
      %v1676 = vand.u32 %v1306, 4294901760
      %1677 = vmatmul.f32.gmra.mxu0 %v1676
      %v1678 = vpop.f32.mrf.mxu0
      %v1679 = vadd.f32 %v1628, %v1678
      %v1680 = vand.u32 %v1309, 4294901760
      %1681 = vmatmul.f32.gmra.mxu0 %v1680
      %v1682 = vpop.f32.mrf.mxu0
      %v1683 = vadd.f32 %v1632, %v1682
      %v1684 = vand.u32 %v1312, 4294901760
      %1685 = vmatmul.f32.gmra.mxu0 %v1684
      %v1686 = vpop.f32.mrf.mxu0
      %v1687 = vadd.f32 %v1636, %v1686
      %v1688 = vand.u32 %v1315, 4294901760
      %1689 = vmatmul.f32.gmra.mxu0 %v1688
      %v1690 = vpop.f32.mrf.mxu0
      %v1691 = vadd.f32 %v1640, %v1690
      %v1692 = vand.u32 %v1318, 4294901760
      %1693 = vmatmul.f32.gmra.mxu0 %v1692
      %v1694 = vpop.f32.mrf.mxu0
      %v1695 = vadd.f32 %v1644, %v1694
      %v1696 = vand.u32 %v1321, 4294901760
      %1697 = vmatmul.f32.gmra.mxu0 %v1696
      %v1698 = vpop.f32.mrf.mxu0
      %v1699 = vadd.f32 %v1648, %v1698
      %v1700 = vand.u32 %v1324, 4294901760
      %1701 = vmatmul.f32.gmra.mxu0 %v1700
      %v1702 = vpop.f32.mrf.mxu0
      %v1703 = vadd.f32 %v1652, %v1702
      %1704 = vdwg.mxu0
      %vm1713 = vcmask 1046528
      %v1714 = vrot.slane %v729, 1
      %v1715 = vrot.slane %v889, 1
      %v1716 = vsel %vm1713, %v1714, %v1715
      %v1717 = vrot.slane %v730, 1
      %v1718 = vrot.slane %v890, 1
      %v1719 = vsel %vm1713, %v1717, %v1718
      %v1720 = vrot.slane %v731, 1
      %v1721 = vrot.slane %v891, 1
      %v1722 = vsel %vm1713, %v1720, %v1721
      %v1723 = vrot.slane %v732, 1
      %v1724 = vrot.slane %v892, 1
      %v1725 = vsel %vm1713, %v1723, %v1724
      %v1726 = vrot.slane %v733, 1
      %v1727 = vrot.slane %v893, 1
      %v1728 = vsel %vm1713, %v1726, %v1727
      %v1729 = vrot.slane %v734, 1
      %v1730 = vrot.slane %v894, 1
      %v1731 = vsel %vm1713, %v1729, %v1730
      %v1732 = vrot.slane %v735, 1
      %v1733 = vrot.slane %v895, 1
      %v1734 = vsel %vm1713, %v1732, %v1733
      %v1735 = vrot.slane %v736, 1
      %v1736 = vrot.slane %v896, 1
      %v1737 = vsel %vm1713, %v1735, %v1736
      %v1738 = vsel %vm897, %v1716, 0
      %v1740 = vsel %vm897, %v1719, 0
      %v1742 = vsel %vm897, %v1722, 0
      %v1744 = vsel %vm897, %v1725, 0
      %v1746 = vsel %vm897, %v1728, 0
      %v1748 = vsel %vm897, %v1731, 0
      %v1750 = vsel %vm897, %v1734, 0
      %v1752 = vsel %vm897, %v1737, 0
      %v1755 = vsel %vm922, %v653, 0
      %1757 = vmatpush.msra.mxu0 0.0
      %1758 = vmatpush.msra.mxu0 0.0
      %1759 = vmatpush.msra.mxu0 0.0
      %1760 = vmatpush.msra.mxu0 0.0
      %1761 = vmatpush.msra.mxu0 0.0
      %1762 = vmatpush.msra.mxu0 0.0
      %1763 = vmatpush.msra.mxu0 0.0
      %1764 = vmatpush.msra.mxu0 0.0
      %1765 = vmatpush.msra.mxu0 0.0
      %1766 = vmatpush.msra.mxu0 0.0
      %1767 = vmatpush.msra.mxu0 0.0
      %1768 = vmatpush.msra.mxu0 0.0
      %1769 = vmatpush.msra.mxu0 0.0
      %1770 = vmatpush.msra.mxu0 0.0
      %v1771 = vand.u32 %v1755, 4294901760
      %1772 = vmatpush.msra.mxu0 %v1771
      %v1773 = vand.u32 %v652, 4294901760
      %1774 = vmatpush.msra.mxu0 %v1773
      %v1775 = vand.u32 %v1738, 4294901760
      %v1776 = vsub.f32 %v1738, %v1775
      %v1777 = vand.u32 %v1776, 4294901760
      %v1778 = vsub.f32 %v1776, %v1777
      %v1779 = vand.u32 %v1778, 4294901760
      %1780 = vmatmul.f32.gmra.mxu0 %v1779
      %v1781 = vpop.f32.mrf.mxu0
      %v1782 = vadd.f32 0.0, %v1781
      %v1783 = vand.u32 %v1740, 4294901760
      %v1784 = vsub.f32 %v1740, %v1783
      %v1785 = vand.u32 %v1784, 4294901760
      %v1786 = vsub.f32 %v1784, %v1785
      %v1787 = vand.u32 %v1786, 4294901760
      %1788 = vmatmul.f32.gmra.mxu0 %v1787
      %v1789 = vpop.f32.mrf.mxu0
      %v1790 = vadd.f32 0.0, %v1789
      %v1791 = vand.u32 %v1742, 4294901760
      %v1792 = vsub.f32 %v1742, %v1791
      %v1793 = vand.u32 %v1792, 4294901760
      %v1794 = vsub.f32 %v1792, %v1793
      %v1795 = vand.u32 %v1794, 4294901760
      %1796 = vmatmul.f32.gmra.mxu0 %v1795
      %v1797 = vpop.f32.mrf.mxu0
      %v1798 = vadd.f32 0.0, %v1797
      %v1799 = vand.u32 %v1744, 4294901760
      %v1800 = vsub.f32 %v1744, %v1799
      %v1801 = vand.u32 %v1800, 4294901760
      %v1802 = vsub.f32 %v1800, %v1801
      %v1803 = vand.u32 %v1802, 4294901760
      %1804 = vmatmul.f32.gmra.mxu0 %v1803
      %v1805 = vpop.f32.mrf.mxu0
      %v1806 = vadd.f32 0.0, %v1805
      %v1807 = vand.u32 %v1746, 4294901760
      %v1808 = vsub.f32 %v1746, %v1807
      %v1809 = vand.u32 %v1808, 4294901760
      %v1810 = vsub.f32 %v1808, %v1809
      %v1811 = vand.u32 %v1810, 4294901760
      %1812 = vmatmul.f32.gmra.mxu0 %v1811
      %v1813 = vpop.f32.mrf.mxu0
      %v1814 = vadd.f32 0.0, %v1813
      %v1815 = vand.u32 %v1748, 4294901760
      %v1816 = vsub.f32 %v1748, %v1815
      %v1817 = vand.u32 %v1816, 4294901760
      %v1818 = vsub.f32 %v1816, %v1817
      %v1819 = vand.u32 %v1818, 4294901760
      %1820 = vmatmul.f32.gmra.mxu0 %v1819
      %v1821 = vpop.f32.mrf.mxu0
      %v1822 = vadd.f32 0.0, %v1821
      %v1823 = vand.u32 %v1750, 4294901760
      %v1824 = vsub.f32 %v1750, %v1823
      %v1825 = vand.u32 %v1824, 4294901760
      %v1826 = vsub.f32 %v1824, %v1825
      %v1827 = vand.u32 %v1826, 4294901760
      %1828 = vmatmul.f32.gmra.mxu0 %v1827
      %v1829 = vpop.f32.mrf.mxu0
      %v1830 = vadd.f32 0.0, %v1829
      %v1831 = vand.u32 %v1752, 4294901760
      %v1832 = vsub.f32 %v1752, %v1831
      %v1833 = vand.u32 %v1832, 4294901760
      %v1834 = vsub.f32 %v1832, %v1833
      %v1835 = vand.u32 %v1834, 4294901760
      %1836 = vmatmul.f32.gmra.mxu0 %v1835
      %v1837 = vpop.f32.mrf.mxu0
      %v1838 = vadd.f32 0.0, %v1837
      %1839 = vdwg.mxu0
      %1840 = vmatpush.msra.mxu0 0.0
      %1841 = vmatpush.msra.mxu0 0.0
      %1842 = vmatpush.msra.mxu0 0.0
      %1843 = vmatpush.msra.mxu0 0.0
      %1844 = vmatpush.msra.mxu0 0.0
      %1845 = vmatpush.msra.mxu0 0.0
      %1846 = vmatpush.msra.mxu0 0.0
      %1847 = vmatpush.msra.mxu0 0.0
      %1848 = vmatpush.msra.mxu0 0.0
      %1849 = vmatpush.msra.mxu0 0.0
      %1850 = vmatpush.msra.mxu0 0.0
      %1851 = vmatpush.msra.mxu0 0.0
      %1852 = vmatpush.msra.mxu0 0.0
      %1853 = vmatpush.msra.mxu0 0.0
      %v1854 = vand.u32 %v1755, 4294901760
      %v1855 = vsub.f32 %v1755, %v1854
      %v1856 = vand.u32 %v1855, 4294901760
      %v1857 = vsub.f32 %v1855, %v1856
      %v1858 = vand.u32 %v1857, 4294901760
      %1859 = vmatpush.msra.mxu0 %v1858
      %v1860 = vand.u32 %v652, 4294901760
      %v1861 = vsub.f32 %v652, %v1860
      %v1862 = vand.u32 %v1861, 4294901760
      %v1863 = vsub.f32 %v1861, %v1862
      %v1864 = vand.u32 %v1863, 4294901760
      %1865 = vmatpush.msra.mxu0 %v1864
      %v1866 = vand.u32 %v1738, 4294901760
      %1867 = vmatmul.f32.gmra.mxu0 %v1866
      %v1868 = vpop.f32.mrf.mxu0
      %v1869 = vadd.f32 %v1782, %v1868
      %v1870 = vand.u32 %v1740, 4294901760
      %1871 = vmatmul.f32.gmra.mxu0 %v1870
      %v1872 = vpop.f32.mrf.mxu0
      %v1873 = vadd.f32 %v1790, %v1872
      %v1874 = vand.u32 %v1742, 4294901760
      %1875 = vmatmul.f32.gmra.mxu0 %v1874
      %v1876 = vpop.f32.mrf.mxu0
      %v1877 = vadd.f32 %v1798, %v1876
      %v1878 = vand.u32 %v1744, 4294901760
      %1879 = vmatmul.f32.gmra.mxu0 %v1878
      %v1880 = vpop.f32.mrf.mxu0
      %v1881 = vadd.f32 %v1806, %v1880
      %v1882 = vand.u32 %v1746, 4294901760
      %1883 = vmatmul.f32.gmra.mxu0 %v1882
      %v1884 = vpop.f32.mrf.mxu0
      %v1885 = vadd.f32 %v1814, %v1884
      %v1886 = vand.u32 %v1748, 4294901760
      %1887 = vmatmul.f32.gmra.mxu0 %v1886
      %v1888 = vpop.f32.mrf.mxu0
      %v1889 = vadd.f32 %v1822, %v1888
      %v1890 = vand.u32 %v1750, 4294901760
      %1891 = vmatmul.f32.gmra.mxu0 %v1890
      %v1892 = vpop.f32.mrf.mxu0
      %v1893 = vadd.f32 %v1830, %v1892
      %v1894 = vand.u32 %v1752, 4294901760
      %1895 = vmatmul.f32.gmra.mxu0 %v1894
      %v1896 = vpop.f32.mrf.mxu0
      %v1897 = vadd.f32 %v1838, %v1896
      %1898 = vdwg.mxu0
      %1899 = vmatpush.msra.mxu0 0.0
      %1900 = vmatpush.msra.mxu0 0.0
      %1901 = vmatpush.msra.mxu0 0.0
      %1902 = vmatpush.msra.mxu0 0.0
      %1903 = vmatpush.msra.mxu0 0.0
      %1904 = vmatpush.msra.mxu0 0.0
      %1905 = vmatpush.msra.mxu0 0.0
      %1906 = vmatpush.msra.mxu0 0.0
      %1907 = vmatpush.msra.mxu0 0.0
      %1908 = vmatpush.msra.mxu0 0.0
      %1909 = vmatpush.msra.mxu0 0.0
      %1910 = vmatpush.msra.mxu0 0.0
      %1911 = vmatpush.msra.mxu0 0.0
      %1912 = vmatpush.msra.mxu0 0.0
      %v1913 = vand.u32 %v1755, 4294901760
      %v1914 = vsub.f32 %v1755, %v1913
      %1915 = vmatpush.msra.mxu0 %v1914
      %v1916 = vand.u32 %v652, 4294901760
      %v1917 = vsub.f32 %v652, %v1916
      %1918 = vmatpush.msra.mxu0 %v1917
      %v1919 = vand.u32 %v1738, 4294901760
      %v1920 = vsub.f32 %v1738, %v1919
      %1921 = vmatmul.f32.gmra.mxu0 %v1920
      %v1922 = vpop.f32.mrf.mxu0
      %v1923 = vadd.f32 %v1869, %v1922
      %v1924 = vand.u32 %v1740, 4294901760
      %v1925 = vsub.f32 %v1740, %v1924
      %1926 = vmatmul.f32.gmra.mxu0 %v1925
      %v1927 = vpop.f32.mrf.mxu0
      %v1928 = vadd.f32 %v1873, %v1927
      %v1929 = vand.u32 %v1742, 4294901760
      %v1930 = vsub.f32 %v1742, %v1929
      %1931 = vmatmul.f32.gmra.mxu0 %v1930
      %v1932 = vpop.f32.mrf.mxu0
      %v1933 = vadd.f32 %v1877, %v1932
      %v1934 = vand.u32 %v1744, 4294901760
      %v1935 = vsub.f32 %v1744, %v1934
      %1936 = vmatmul.f32.gmra.mxu0 %v1935
      %v1937 = vpop.f32.mrf.mxu0
      %v1938 = vadd.f32 %v1881, %v1937
      %v1939 = vand.u32 %v1746, 4294901760
      %v1940 = vsub.f32 %v1746, %v1939
      %1941 = vmatmul.f32.gmra.mxu0 %v1940
      %v1942 = vpop.f32.mrf.mxu0
      %v1943 = vadd.f32 %v1885, %v1942
      %v1944 = vand.u32 %v1748, 4294901760
      %v1945 = vsub.f32 %v1748, %v1944
      %1946 = vmatmul.f32.gmra.mxu0 %v1945
      %v1947 = vpop.f32.mrf.mxu0
      %v1948 = vadd.f32 %v1889, %v1947
      %v1949 = vand.u32 %v1750, 4294901760
      %v1950 = vsub.f32 %v1750, %v1949
      %1951 = vmatmul.f32.gmra.mxu0 %v1950
      %v1952 = vpop.f32.mrf.mxu0
      %v1953 = vadd.f32 %v1893, %v1952
      %v1954 = vand.u32 %v1752, 4294901760
      %v1955 = vsub.f32 %v1752, %v1954
      %1956 = vmatmul.f32.gmra.mxu0 %v1955
      %v1957 = vpop.f32.mrf.mxu0
      %v1958 = vadd.f32 %v1897, %v1957
      %1959 = vdwg.mxu0
      %1960 = vmatpush.msra.mxu0 0.0
      %1961 = vmatpush.msra.mxu0 0.0
      %1962 = vmatpush.msra.mxu0 0.0
      %1963 = vmatpush.msra.mxu0 0.0
      %1964 = vmatpush.msra.mxu0 0.0
      %1965 = vmatpush.msra.mxu0 0.0
      %1966 = vmatpush.msra.mxu0 0.0
      %1967 = vmatpush.msra.mxu0 0.0
      %1968 = vmatpush.msra.mxu0 0.0
      %1969 = vmatpush.msra.mxu0 0.0
      %1970 = vmatpush.msra.mxu0 0.0
      %1971 = vmatpush.msra.mxu0 0.0
      %1972 = vmatpush.msra.mxu0 0.0
      %1973 = vmatpush.msra.mxu0 0.0
      %v1974 = vand.u32 %v1755, 4294901760
      %1975 = vmatpush.msra.mxu0 %v1974
      %v1976 = vand.u32 %v652, 4294901760
      %1977 = vmatpush.msra.mxu0 %v1976
      %v1978 = vand.u32 %v1738, 4294901760
      %v1979 = vsub.f32 %v1738, %v1978
      %v1980 = vand.u32 %v1979, 4294901760
      %1981 = vmatmul.f32.gmra.mxu0 %v1980
      %v1982 = vpop.f32.mrf.mxu0
      %v1983 = vadd.f32 %v1923, %v1982
      %v1984 = vand.u32 %v1740, 4294901760
      %v1985 = vsub.f32 %v1740, %v1984
      %v1986 = vand.u32 %v1985, 4294901760
      %1987 = vmatmul.f32.gmra.mxu0 %v1986
      %v1988 = vpop.f32.mrf.mxu0
      %v1989 = vadd.f32 %v1928, %v1988
      %v1990 = vand.u32 %v1742, 4294901760
      %v1991 = vsub.f32 %v1742, %v1990
      %v1992 = vand.u32 %v1991, 4294901760
      %1993 = vmatmul.f32.gmra.mxu0 %v1992
      %v1994 = vpop.f32.mrf.mxu0
      %v1995 = vadd.f32 %v1933, %v1994
      %v1996 = vand.u32 %v1744, 4294901760
      %v1997 = vsub.f32 %v1744, %v1996
      %v1998 = vand.u32 %v1997, 4294901760
      %1999 = vmatmul.f32.gmra.mxu0 %v1998
      %v2000 = vpop.f32.mrf.mxu0
      %v2001 = vadd.f32 %v1938, %v2000
      %v2002 = vand.u32 %v1746, 4294901760
      %v2003 = vsub.f32 %v1746, %v2002
      %v2004 = vand.u32 %v2003, 4294901760
      %2005 = vmatmul.f32.gmra.mxu0 %v2004
      %v2006 = vpop.f32.mrf.mxu0
      %v2007 = vadd.f32 %v1943, %v2006
      %v2008 = vand.u32 %v1748, 4294901760
      %v2009 = vsub.f32 %v1748, %v2008
      %v2010 = vand.u32 %v2009, 4294901760
      %2011 = vmatmul.f32.gmra.mxu0 %v2010
      %v2012 = vpop.f32.mrf.mxu0
      %v2013 = vadd.f32 %v1948, %v2012
      %v2014 = vand.u32 %v1750, 4294901760
      %v2015 = vsub.f32 %v1750, %v2014
      %v2016 = vand.u32 %v2015, 4294901760
      %2017 = vmatmul.f32.gmra.mxu0 %v2016
      %v2018 = vpop.f32.mrf.mxu0
      %v2019 = vadd.f32 %v1953, %v2018
      %v2020 = vand.u32 %v1752, 4294901760
      %v2021 = vsub.f32 %v1752, %v2020
      %v2022 = vand.u32 %v2021, 4294901760
      %2023 = vmatmul.f32.gmra.mxu0 %v2022
      %v2024 = vpop.f32.mrf.mxu0
      %v2025 = vadd.f32 %v1958, %v2024
      %2026 = vdwg.mxu0
      %2027 = vmatpush.msra.mxu0 0.0
      %2028 = vmatpush.msra.mxu0 0.0
      %2029 = vmatpush.msra.mxu0 0.0
      %2030 = vmatpush.msra.mxu0 0.0
      %2031 = vmatpush.msra.mxu0 0.0
      %2032 = vmatpush.msra.mxu0 0.0
      %2033 = vmatpush.msra.mxu0 0.0
      %2034 = vmatpush.msra.mxu0 0.0
      %2035 = vmatpush.msra.mxu0 0.0
      %2036 = vmatpush.msra.mxu0 0.0
      %2037 = vmatpush.msra.mxu0 0.0
      %2038 = vmatpush.msra.mxu0 0.0
      %2039 = vmatpush.msra.mxu0 0.0
      %2040 = vmatpush.msra.mxu0 0.0
      %v2041 = vand.u32 %v1755, 4294901760
      %v2042 = vsub.f32 %v1755, %v2041
      %v2043 = vand.u32 %v2042, 4294901760
      %2044 = vmatpush.msra.mxu0 %v2043
      %v2045 = vand.u32 %v652, 4294901760
      %v2046 = vsub.f32 %v652, %v2045
      %v2047 = vand.u32 %v2046, 4294901760
      %2048 = vmatpush.msra.mxu0 %v2047
      %v2049 = vand.u32 %v1738, 4294901760
      %2050 = vmatmul.f32.gmra.mxu0 %v2049
      %v2051 = vpop.f32.mrf.mxu0
      %v2052 = vadd.f32 %v1983, %v2051
      %v2053 = vand.u32 %v1740, 4294901760
      %2054 = vmatmul.f32.gmra.mxu0 %v2053
      %v2055 = vpop.f32.mrf.mxu0
      %v2056 = vadd.f32 %v1989, %v2055
      %v2057 = vand.u32 %v1742, 4294901760
      %2058 = vmatmul.f32.gmra.mxu0 %v2057
      %v2059 = vpop.f32.mrf.mxu0
      %v2060 = vadd.f32 %v1995, %v2059
      %v2061 = vand.u32 %v1744, 4294901760
      %2062 = vmatmul.f32.gmra.mxu0 %v2061
      %v2063 = vpop.f32.mrf.mxu0
      %v2064 = vadd.f32 %v2001, %v2063
      %v2065 = vand.u32 %v1746, 4294901760
      %2066 = vmatmul.f32.gmra.mxu0 %v2065
      %v2067 = vpop.f32.mrf.mxu0
      %v2068 = vadd.f32 %v2007, %v2067
      %v2069 = vand.u32 %v1748, 4294901760
      %2070 = vmatmul.f32.gmra.mxu0 %v2069
      %v2071 = vpop.f32.mrf.mxu0
      %v2072 = vadd.f32 %v2013, %v2071
      %v2073 = vand.u32 %v1750, 4294901760
      %2074 = vmatmul.f32.gmra.mxu0 %v2073
      %v2075 = vpop.f32.mrf.mxu0
      %v2076 = vadd.f32 %v2019, %v2075
      %v2077 = vand.u32 %v1752, 4294901760
      %2078 = vmatmul.f32.gmra.mxu0 %v2077
      %v2079 = vpop.f32.mrf.mxu0
      %v2080 = vadd.f32 %v2025, %v2079
      %2081 = vdwg.mxu0
      %2082 = vmatpush.msra.mxu0 0.0
      %2083 = vmatpush.msra.mxu0 0.0
      %2084 = vmatpush.msra.mxu0 0.0
      %2085 = vmatpush.msra.mxu0 0.0
      %2086 = vmatpush.msra.mxu0 0.0
      %2087 = vmatpush.msra.mxu0 0.0
      %2088 = vmatpush.msra.mxu0 0.0
      %2089 = vmatpush.msra.mxu0 0.0
      %2090 = vmatpush.msra.mxu0 0.0
      %2091 = vmatpush.msra.mxu0 0.0
      %2092 = vmatpush.msra.mxu0 0.0
      %2093 = vmatpush.msra.mxu0 0.0
      %2094 = vmatpush.msra.mxu0 0.0
      %2095 = vmatpush.msra.mxu0 0.0
      %v2096 = vand.u32 %v1755, 4294901760
      %2097 = vmatpush.msra.mxu0 %v2096
      %v2098 = vand.u32 %v652, 4294901760
      %2099 = vmatpush.msra.mxu0 %v2098
      %v2100 = vand.u32 %v1738, 4294901760
      %2101 = vmatmul.f32.gmra.mxu0 %v2100
      %v2102 = vpop.f32.mrf.mxu0
      %v2103 = vadd.f32 %v2052, %v2102
      %v2104 = vand.u32 %v1740, 4294901760
      %2105 = vmatmul.f32.gmra.mxu0 %v2104
      %v2106 = vpop.f32.mrf.mxu0
      %v2107 = vadd.f32 %v2056, %v2106
      %v2108 = vand.u32 %v1742, 4294901760
      %2109 = vmatmul.f32.gmra.mxu0 %v2108
      %v2110 = vpop.f32.mrf.mxu0
      %v2111 = vadd.f32 %v2060, %v2110
      %v2112 = vand.u32 %v1744, 4294901760
      %2113 = vmatmul.f32.gmra.mxu0 %v2112
      %v2114 = vpop.f32.mrf.mxu0
      %v2115 = vadd.f32 %v2064, %v2114
      %v2116 = vand.u32 %v1746, 4294901760
      %2117 = vmatmul.f32.gmra.mxu0 %v2116
      %v2118 = vpop.f32.mrf.mxu0
      %v2119 = vadd.f32 %v2068, %v2118
      %v2120 = vand.u32 %v1748, 4294901760
      %2121 = vmatmul.f32.gmra.mxu0 %v2120
      %v2122 = vpop.f32.mrf.mxu0
      %v2123 = vadd.f32 %v2072, %v2122
      %v2124 = vand.u32 %v1750, 4294901760
      %2125 = vmatmul.f32.gmra.mxu0 %v2124
      %v2126 = vpop.f32.mrf.mxu0
      %v2127 = vadd.f32 %v2076, %v2126
      %v2128 = vand.u32 %v1752, 4294901760
      %2129 = vmatmul.f32.gmra.mxu0 %v2128
      %v2130 = vpop.f32.mrf.mxu0
      %v2131 = vadd.f32 %v2080, %v2130
      %2132 = vdwg.mxu0
      %v2133 = vadd.f32 %v1675, %v2103
      %v2134 = vadd.f32 %v1679, %v2107
      %v2135 = vadd.f32 %v1683, %v2111
      %v2136 = vadd.f32 %v1687, %v2115
      %v2137 = vadd.f32 %v1691, %v2119
      %v2138 = vadd.f32 %v1695, %v2123
      %v2139 = vadd.f32 %v1699, %v2127
      %v2140 = vadd.f32 %v1703, %v2131
      %v2142 = vperm.slane %v654, 0
      %v2144 = vadd.f32 %v2133, %v2142
      %v2145 = vadd.f32 %v2134, %v2142
      %v2146 = vadd.f32 %v2135, %v2142
      %v2147 = vadd.f32 %v2136, %v2142
      %v2148 = vadd.f32 %v2137, %v2142
      %v2149 = vadd.f32 %v2138, %v2142
      %v2150 = vadd.f32 %v2139, %v2142
      %v2151 = vadd.f32 %v2140, %v2142
      %2152 = vst.msk [vmem:[%s595] sm:$0xff] %vm719, %v2144
      %2153 = vst.msk [vmem:[%s595 + $0x8] sm:$0xff] %vm719, %v2145
      %2154 = vst.msk [vmem:[%s595 + $0x10] sm:$0xff] %vm719, %v2146
      %2155 = vst.msk [vmem:[%s595 + $0x18] sm:$0xff] %vm719, %v2147
      %2156 = vst.msk [vmem:[%s595 + $0x20] sm:$0xff] %vm719, %v2148
      %2157 = vst.msk [vmem:[%s595 + $0x28] sm:$0xff] %vm719, %v2149
      %2158 = vst.msk [vmem:[%s595 + $0x30] sm:$0xff] %vm719, %v2150
      %2159 = vst.msk [vmem:[%s595 + $0x38] sm:$0xff] %vm719, %v2151
      %s2160 = smul.u32 8, %s24
      %p2161 = scmp.lt.s32.totalorder %s23, 1
      %s2162 = scalar_select %p2161, %s23, 1
      %p2163 = scmp.lt.s32.totalorder %s2160, 7
      %s2164 = scalar_select %p2163, %s2160, 7
      %s2165 = smul.addr %s2162, 8
      %s2166 = sadd.s32 %s2164, %s2165
      %s2167 = smul.addr %s2166, 8
      %s2168 = scalar_lea.vmem %s8, %s2167
      // Predicated region
      $region53: #{chameleon_conv_downsample.1} parent=51 // pred_check
        %p2169 = pneg %p269
      $region54: #{chameleon_conv_downsample.1} parent=51 // pred_check_branch
        %2171 = sbr.rel (%p2169) target = $region56
      $region55: #{chameleon_conv_downsample.1} parent=51 // pred_region
        %s2172 = smul.u32 8, %s24
      $region56: #{chameleon_conv_downsample.1} parent=51 // pred_fallthru
        _
    $region52: #{chameleon_conv_downsample.1} parent=5 // pred_fallthru
      _
    %p2173 = scmp.le.s32.totalorder 2, %s14
    // Predicated region
    $region57: #{chameleon_conv_downsample.1} parent=5 // pred_check
      %p2174 = pneg %p2173
    $region58: #{chameleon_conv_downsample.1} parent=5 // pred_check_branch
      %2176 = sbr.rel (%p2174) target = $region60
    $region59: #{chameleon_conv_downsample.1} parent=5 // pred_region
      %s2177 = ssub.s32 %s14, 2
      // Predicated region
      $region61: #{chameleon_conv_downsample.1} parent=59 // pred_check
        %p2178 = pneg %p275
      $region62: #{chameleon_conv_downsample.1} parent=59 // pred_check_branch
        %2180 = sbr.rel (%p2178) target = $region64
      $region63: #{chameleon_conv_downsample.1} parent=59 // pred_region
        %s2181 = smul.u32 8, %s26
        %p2182 = scmp.lt.s32.totalorder %s25, 1
        %s2183 = scalar_select %p2182, %s25, 1
        %p2184 = scmp.lt.s32.totalorder %s2181, 7
        %s2185 = scalar_select %p2184, %s2181, 7
        %s2186 = smul.addr %s2183, 8
        %s2187 = sadd.s32 %s2185, %s2186
        %s2188 = smul.addr %s2187, 8
        %s2189 = scalar_lea.vmem %s8, %s2188
      $region64: #{chameleon_conv_downsample.1} parent=59 // pred_fallthru
        _
    $region60: #{chameleon_conv_downsample.1} parent=5 // pred_fallthru
      _
  $region6: #{chameleon_conv_downsample.1} parent=0 // loop_footer
    %s18 = sadd.s32 1, %s14
  $region7: #{chameleon_conv_downsample.1} parent=0 // loop_footer_branch
    %13 = sbr.rel target = $region3
  $region8: #{chameleon_conv_downsample.1} parent=0 // loop_exit
    _

</llo_original>
